<compile_context>
chip_gen: v5e
topology: v5e:2x2
jax: 0.10.0
libtpu: 0.0.40
codegen_flags: <defaults>
</compile_context>

<pallas_src>
import math

import jax
import jax.numpy as jnp
from jax.experimental import pallas as pl
from jax.experimental.pallas import tpu as pltpu


def _round_up(x, m):
    return ((x + m - 1) // m) * m


def _make_kernel(*, nhead, head_dim, tile_kv, kv_len, mask_kv, compute_dtype):
    H, Dh = nhead, head_dim
    f32 = jnp.float32
    cd = compute_dtype
    approx_recip = (cd != f32)

    def kernel(tgt_ref, qpos_ref, mem_ref, pos_ref,
               wq_ref, wk_ref, wv_ref, wo_ref,
               bq_ref, bv_ref, bo_ref,
               g_ref, beta_ref,
               o_ref,
               q_scr, m_scr, l_scr, acc_scr):
        ki = pl.program_id(2)
        nk = pl.num_programs(2)

        # ---- per-(b, qi) prologue: hoisted (scaled) q projection + init ----
        @pl.when(ki == 0)
        def _init():
            m_scr[...] = jnp.full_like(m_scr, -jnp.inf)
            l_scr[...] = jnp.zeros_like(l_scr)
            acc_scr[...] = jnp.zeros_like(acc_scr)
            # 1/sqrt(Dh) is already folded into Wq / bq by the wrapper.
            x_q = (tgt_ref[0].astype(f32) + qpos_ref[0].astype(f32)).astype(cd)
            q = jnp.dot(x_q, wq_ref[...],
                        preferred_element_type=f32) + bq_ref[...]
            for h in range(H):
                q_scr[h] = q[:, h * Dh:(h + 1) * Dh].astype(cd)

        # ---- k / v projections for this kv tile (fused over heads, N=D) ----
        x_k = mem_ref[0] + pos_ref[0]                       # (TS, D), cd
        # No key bias: softmax-invariant (q.bk constant over the kv index).
        k = jnp.dot(x_k, wk_ref[...], preferred_element_type=f32).astype(cd)
        v = (jnp.dot(mem_ref[0], wv_ref[...], preferred_element_type=f32)
             + bv_ref[...]).astype(cd)

        if mask_kv:
            # Additive bias: zero everywhere except the padded tail of the
            # last kv tile; computed once per step (not per head).
            kv_idx = ki * tile_kv + jax.lax.broadcasted_iota(
                jnp.int32, (1, tile_kv), 1)
            neg_bias = jnp.where(kv_idx < kv_len, 0.0, -1e30).astype(f32)

        # ---- per-head online softmax over the kv grid axis ----
        for h in range(H):
            hs = h * Dh
            q_h = q_scr[h]                                  # (TQ, Dh), cd
            k_h = k[:, hs:hs + Dh]                          # (TS, Dh), cd
            v_h = v[:, hs:hs + Dh]                          # (TS, Dh), cd

            s_h = jax.lax.dot_general(                      # q_h @ k_h^T
                q_h, k_h, (((1,), (1,)), ((), ())),
                preferred_element_type=f32)                 # (TQ, TS), f32
            if mask_kv:
                s_h = s_h + neg_bias

            m_prev = m_scr[h]                               # (TQ, 1), f32
            m_new = jnp.maximum(m_prev, jnp.max(s_h, axis=-1, keepdims=True))
            alpha = jnp.exp(m_prev - m_new)                 # f32
            # bf16 exp (EUP fast path on v6e/v7x) when compute_dtype is bf16;
            # the bf16 p feeds the PV matmul directly (no extra cast).
            p = jnp.exp((s_h - m_new).astype(cd))           # (TQ, TS), cd

            l_scr[h] = alpha * l_scr[h] + jnp.sum(
                p.astype(f32), axis=-1, keepdims=True)
            acc_scr[h] = alpha * acc_scr[h] + jnp.dot(
                p, v_h, preferred_element_type=f32)
            m_scr[h] = m_new

        # ---- finalize: normalize, out-proj (head-major), residual, LN ----
        @pl.when(ki == nk - 1)
        def _finalize():
            out = bo_ref[...].astype(f32)                    # (1, D), bcast
            for h in range(H):
                inv_l = pl.reciprocal(l_scr[h], approx=approx_recip)
                a_h = (acc_scr[h] * inv_l).astype(cd)        # (TQ, Dh)
                out = out + jnp.dot(a_h, wo_ref[h],
                                    preferred_element_type=f32)
            y = tgt_ref[0].astype(f32) + out                 # residual, f32
            mean = jnp.mean(y, axis=-1, keepdims=True)
            yc = y - mean
            var = jnp.mean(yc * yc, axis=-1, keepdims=True)
            y_hat = yc * jax.lax.rsqrt(var + 1e-5)
            o_ref[0] = (y_hat * g_ref[...] + beta_ref[...]).astype(o_ref.dtype)

    return kernel


def cross_attention_layer_forward(
        tgt, memory, query_pos, pos, params, *, nhead,
        tile_q=128, tile_kv=512, compute_dtype=jnp.bfloat16,
        vmem_limit_bytes=48 * 1024 * 1024):
    """Fused CrossAttentionLayer.forward (normalize_before=False, dropout=0).

    tgt:       (L, B, D)  queries
    memory:    (S, B, D)  keys/values source
    query_pos: (L, B, D)
    pos:       (S, B, D)
    params:    dict with in_proj_weight (3D,D), in_proj_bias (3D,),
               out_proj_weight (D,D), out_proj_bias (D,),
               norm_weight (D,), norm_bias (D,)

    Tuning notes: v5e/v6e can raise tile_kv to 1024-2048 and tile_q to 256
    when L allows; keep vmem_limit_bytes <= ~48 MiB on v7x (64 MiB physical).
    """
    # TODO(synk): memory_mask / memory_key_padding_mask are not implemented
    # (matches the mask=None call path of the PyTorch module); only the
    # post-norm (normalize_before=False) branch is implemented.
    L, B, D = tgt.shape
    S = memory.shape[0]
    H = nhead
    assert D % H == 0
    Dh = D // H
    f32 = jnp.float32
    cd = compute_dtype
    scale = 1.0 / math.sqrt(Dh)

    wq = params["in_proj_weight"][:D]
    wk = params["in_proj_weight"][D:2 * D]
    wv = params["in_proj_weight"][2 * D:]
    bq = params["in_proj_bias"][:D]
    bv = params["in_proj_bias"][2 * D:]
    wo = params["out_proj_weight"]
    bo = params["out_proj_bias"]
    gamma = params["norm_weight"]
    beta = params["norm_bias"]

    # Batch-major (B, seq, D): D stays the lane dim. The dominant memory/pos
    # streams go straight to the compute dtype (half the kernel DMA bytes);
    # tgt/query_pos stay f32 (small, fetched once per query tile, needed at
    # f32 for the residual/LayerNorm). In a real pipeline these would already
    # arrive batch-major in bf16; here transpose+cast is one fused XLA copy.
    tgt_b = jnp.transpose(tgt, (1, 0, 2)).astype(f32)
    qpos_b = jnp.transpose(query_pos, (1, 0, 2)).astype(f32)
    mem_b = jnp.transpose(memory, (1, 0, 2)).astype(cd)
    pos_b = jnp.transpose(pos, (1, 0, 2)).astype(cd)

    # Tile sizes: multiples of 8 sublanes; pad tails (kv tail is masked
    # in-kernel, padded query rows are sliced off afterwards).
    TQ = min(tile_q, _round_up(L, 8))
    TS = min(tile_kv, _round_up(S, 8))
    L_pad = _round_up(L, TQ)
    S_pad = _round_up(S, TS)
    if L_pad != L:
        padw = ((0, 0), (0, L_pad - L), (0, 0))
        tgt_b = jnp.pad(tgt_b, padw)
        qpos_b = jnp.pad(qpos_b, padw)
    if S_pad != S:
        padw = ((0, 0), (0, S_pad - S), (0, 0))
        mem_b = jnp.pad(mem_b, padw)
        pos_b = jnp.pad(pos_b, padw)

    # Weights pre-transposed to (in, out) and cast to the compute dtype; the
    # attention scale is folded into Wq / bq (tiny one-time op instead of
    # per-kv-step work). Out-projection weight is head-major (H, Dh, D) so
    # the finalize avoids any lane-dim slicing. Biases / LN params stay f32.
    wqt = (wq.T * scale).astype(cd)
    wkt = wk.T.astype(cd)
    wvt = wv.T.astype(cd)
    wot_h = wo.T.reshape(H, Dh, D).astype(cd)
    bq2 = (bq * scale).reshape(1, D).astype(f32)
    bv2 = bv.reshape(1, D).astype(f32)
    bo2 = bo.reshape(1, D).astype(f32)
    g2 = gamma.reshape(1, D).astype(f32)
    beta2 = beta.reshape(1, D).astype(f32)

    grid = (B, L_pad // TQ, S_pad // TS)

    kernel = _make_kernel(nhead=H, head_dim=Dh, tile_kv=TS, kv_len=S,
                          mask_kv=(S_pad != S), compute_dtype=cd)

    row_spec_q = pl.BlockSpec((1, TQ, D), lambda b, qi, ki: (b, qi, 0))
    row_spec_kv = pl.BlockSpec((1, TS, D), lambda b, qi, ki: (b, ki, 0))
    w_spec = pl.BlockSpec((D, D), lambda b, qi, ki: (0, 0))
    wo_spec = pl.BlockSpec((H, Dh, D), lambda b, qi, ki: (0, 0, 0))
    vec_spec = pl.BlockSpec((1, D), lambda b, qi, ki: (0, 0))

    out = pl.pallas_call(
        kernel,
        out_shape=jax.ShapeDtypeStruct((B, L_pad, D), tgt.dtype),
        grid=grid,
        in_specs=[
            row_spec_q, row_spec_q, row_spec_kv, row_spec_kv,
            w_spec, w_spec, w_spec, wo_spec,
            vec_spec, vec_spec, vec_spec,
            vec_spec, vec_spec,
        ],
        out_specs=row_spec_q,
        scratch_shapes=[
            pltpu.VMEM((H, TQ, Dh), cd),    # scaled q, hoisted off the kv axis
            pltpu.VMEM((H, TQ, 1), f32),    # running max (head-major)
            pltpu.VMEM((H, TQ, 1), f32),    # running softmax denominator
            pltpu.VMEM((H, TQ, Dh), f32),   # PV accumulator (head-major)
        ],
        compiler_params=pltpu.CompilerParams(
            dimension_semantics=("parallel", "parallel", "arbitrary"),
            vmem_limit_bytes=vmem_limit_bytes,
        ),
    )(tgt_b, qpos_b, mem_b, pos_b,
      wqt, wkt, wvt, wot_h,
      bq2, bv2, bo2, g2, beta2)

    out = out[:, :L, :]
    return jnp.transpose(out, (1, 0, 2))


# ------------------------ reference & test harness ------------------------

def _xavier_uniform(key, shape, dtype=jnp.float32):
    fan_out, fan_in = shape[-2], shape[-1]
    limit = math.sqrt(6.0 / (fan_in + fan_out))
    return jax.random.uniform(key, shape, dtype, minval=-limit, maxval=limit)


def _reference(tgt, memory, query_pos, pos, params, nhead):
    L, B, D = tgt.shape
    S = memory.shape[0]
    H = nhead
    Dh = D // H
    PH = jax.lax.Precision.HIGHEST

    wq = params["in_proj_weight"][:D]
    wk = params["in_proj_weight"][D:2 * D]
    wv = params["in_proj_weight"][2 * D:]
    bq = params["in_proj_bias"][:D]
    bk = params["in_proj_bias"][D:2 * D]
    bv = params["in_proj_bias"][2 * D:]

    q = jnp.einsum("lbd,ed->lbe", tgt + query_pos, wq, precision=PH) + bq
    k = jnp.einsum("sbd,ed->sbe", memory + pos, wk, precision=PH) + bk
    v = jnp.einsum("sbd,ed->sbe", memory, wv, precision=PH) + bv

    qh = q.reshape(L, B, H, Dh)
    kh = k.reshape(S, B, H, Dh)
    vh = v.reshape(S, B, H, Dh)
    s = jnp.einsum("lbhd,sbhd->bhls", qh, kh, precision=PH) * (
        1.0 / math.sqrt(Dh))
    p = jax.nn.softmax(s, axis=-1)
    attn = jnp.einsum("bhls,sbhd->lbhd", p, vh, precision=PH).reshape(L, B, D)
    out = jnp.einsum("lbd,ed->lbe", attn, params["out_proj_weight"],
                     precision=PH) + params["out_proj_bias"]
    y = tgt + out
    mean = jnp.mean(y, axis=-1, keepdims=True)
    var = jnp.mean(jnp.square(y - mean), axis=-1, keepdims=True)
    return ((y - mean) * jax.lax.rsqrt(var + 1e-5) * params["norm_weight"]
            + params["norm_bias"])


if __name__ == "__main__":
    D, H = 32, 4
    key = jax.random.PRNGKey(0)
    ks = jax.random.split(key, 3)

    kp = jax.random.split(ks[0], 6)
    params = dict(
        in_proj_weight=_xavier_uniform(kp[0], (3 * D, D)),
        in_proj_bias=jax.random.uniform(kp[1], (3 * D,), jnp.float32,
                                        minval=-0.05, maxval=0.05),
        out_proj_weight=_xavier_uniform(kp[2], (D, D)),
        out_proj_bias=jax.random.uniform(kp[3], (D,), jnp.float32,
                                         minval=-0.05, maxval=0.05),
        norm_weight=1.0 + 0.05 * jax.random.normal(kp[4], (D,), jnp.float32),
        norm_bias=0.05 * jax.random.normal(kp[5], (D,), jnp.float32),
    )

    def make_inputs(k, L, S, B):
        k1, k2, k3, k4 = jax.random.split(k, 4)
        return (jax.random.normal(k1, (L, B, D), jnp.float32),
                jax.random.normal(k2, (S, B, D), jnp.float32),
                jax.random.normal(k3, (L, B, D), jnp.float32),
                jax.random.normal(k4, (S, B, D), jnp.float32))

    # Case 1: single query tile, single kv tile, f32 compute (tight check).
    tgt, memory, qpos, pos = make_inputs(ks[1], L=8, S=16, B=2)
    out = cross_attention_layer_forward(
        tgt, memory, qpos, pos, params, nhead=H, compute_dtype=jnp.float32)
    out = jax.block_until_ready(out)
    ref = _reference(tgt, memory, qpos, pos, params, nhead=H)
    assert out.shape == tgt.shape
    err = float(jnp.max(jnp.abs(out - ref)))
    assert err < 2e-4, "f32 single-tile mismatch: %g" % err

    # Case 2: multiple query tiles (with padded queries) + multi-step kv
    # reduction with a masked padded tail tile, f32 compute (tight check).
    tgt, memory, qpos, pos = make_inputs(ks[2], L=20, S=40, B=2)
    out = cross_attention_layer_forward(
        tgt, memory, qpos, pos, params, nhead=H, tile_q=8, tile_kv=16,
        compute_dtype=jnp.float32)
    out = jax.block_until_ready(out)
    ref = _reference(tgt, memory, qpos, pos, params, nhead=H)
    err = float(jnp.max(jnp.abs(out - ref)))
    assert err < 2e-4, "f32 tiled mismatch: %g" % err

    # Case 3: bf16 streaming / matmuls / exp with f32 stats (loose check).
    out_bf16 = cross_attention_layer_forward(
        tgt, memory, qpos, pos, params, nhead=H, tile_q=8, tile_kv=16,
        compute_dtype=jnp.bfloat16)
    out_bf16 = jax.block_until_ready(out_bf16)
    err = float(jnp.max(jnp.abs(out_bf16.astype(jnp.float32) - ref)))
    assert err < 0.15, "bf16 path mismatch: %g" % err

    print("KERNEL_OK")
</pallas_src>

<mosaic_0001>
module attributes {stable_mosaic.version = 11 : i64} {
  func.func @kernel(%arg0: i32, %arg1: i32, %arg2: i32, %arg3: memref<1x8x32xf32, #tpu.memory_space<vmem>>, %arg4: memref<1x8x32xf32, #tpu.memory_space<vmem>>, %arg5: memref<1x16x32xf32, #tpu.memory_space<vmem>>, %arg6: memref<1x16x32xf32, #tpu.memory_space<vmem>>, %arg7: memref<32x32xf32, #tpu.memory_space<vmem>>, %arg8: memref<32x32xf32, #tpu.memory_space<vmem>>, %arg9: memref<32x32xf32, #tpu.memory_space<vmem>>, %arg10: memref<4x8x32xf32, #tpu.memory_space<vmem>>, %arg11: memref<1x32xf32, #tpu.memory_space<vmem>>, %arg12: memref<1x32xf32, #tpu.memory_space<vmem>>, %arg13: memref<1x32xf32, #tpu.memory_space<vmem>>, %arg14: memref<1x32xf32, #tpu.memory_space<vmem>>, %arg15: memref<1x32xf32, #tpu.memory_space<vmem>>, %arg16: memref<1x8x32xf32, #tpu.memory_space<vmem>>, %arg17: memref<4x8x8xf32, #tpu.memory_space<vmem>>, %arg18: memref<4x8x1xf32, #tpu.memory_space<vmem>>, %arg19: memref<4x8x1xf32, #tpu.memory_space<vmem>>, %arg20: memref<4x8x8xf32, #tpu.memory_space<vmem>>) attributes {dimension_semantics = [#tpu.dimension_semantics<parallel>, #tpu.dimension_semantics<parallel>, #tpu.dimension_semantics<arbitrary>], iteration_bounds = array<i64: 2, 1, 1>, scalar_prefetch = 0 : i64, scratch_operands = 4 : i64, tpu.core_type = #tpu.core_type<tc>, window_params = [{transform_indices = @transform_0, window_bounds = array<i64: 1, 8, 32>}, {transform_indices = @transform_1, window_bounds = array<i64: 1, 8, 32>}, {transform_indices = @transform_2, window_bounds = array<i64: 1, 16, 32>}, {transform_indices = @transform_3, window_bounds = array<i64: 1, 16, 32>}, {pipeline_mode = #tpu.pipeline_mode<synchronous>, transform_indices = @transform_4, window_bounds = array<i64: 32, 32>}, {pipeline_mode = #tpu.pipeline_mode<synchronous>, transform_indices = @transform_5, window_bounds = array<i64: 32, 32>}, {pipeline_mode = #tpu.pipeline_mode<synchronous>, transform_indices = @transform_6, window_bounds = array<i64: 32, 32>}, {pipeline_mode = #tpu.pipeline_mode<synchronous>, transform_indices = @transform_7, window_bounds = array<i64: 4, 8, 32>}, {pipeline_mode = #tpu.pipeline_mode<synchronous>, transform_indices = @transform_8, window_bounds = array<i64: 1, 32>}, {pipeline_mode = #tpu.pipeline_mode<synchronous>, transform_indices = @transform_9, window_bounds = array<i64: 1, 32>}, {pipeline_mode = #tpu.pipeline_mode<synchronous>, transform_indices = @transform_10, window_bounds = array<i64: 1, 32>}, {pipeline_mode = #tpu.pipeline_mode<synchronous>, transform_indices = @transform_11, window_bounds = array<i64: 1, 32>}, {pipeline_mode = #tpu.pipeline_mode<synchronous>, transform_indices = @transform_12, window_bounds = array<i64: 1, 32>}, {transform_indices = @transform_13, window_bounds = array<i64: 1, 8, 32>}]} {
    %c0_i32 = arith.constant 0 : i32
    %0 = arith.cmpi eq, %arg2, %c0_i32 : i32
    %1 = arith.extui %0 : i1 to i32
    %c0_i32_0 = arith.constant 0 : i32
    %2 = arith.cmpi ne, %1, %c0_i32_0 : i32
    scf.if %2 {
      %cst_115 = arith.constant 0xFF800000 : f32
      %164 = vector.broadcast %cst_115 : f32 to vector<4x8x1xf32>
      %c0_116 = arith.constant 0 : index
      %c0_117 = arith.constant 0 : index
      %c0_118 = arith.constant 0 : index
      %165 = vector.load %arg18[%c0_116, %c0_117, %c0_118] : memref<4x8x1xf32, #tpu.memory_space<vmem>>, vector<4x8x1xf32>
      tpu.vector_store %arg18[%c0_116, %c0_117, %c0_118], %164 {strides = array<i32>} : memref<4x8x1xf32, #tpu.memory_space<vmem>>, vector<4x8x1xf32>,
      %cst_119 = arith.constant 0.000000e+00 : f32
      %166 = vector.broadcast %cst_119 : f32 to vector<4x8x1xf32>
      %c0_120 = arith.constant 0 : index
      %c0_121 = arith.constant 0 : index
      %c0_122 = arith.constant 0 : index
      %167 = vector.load %arg19[%c0_120, %c0_121, %c0_122] : memref<4x8x1xf32, #tpu.memory_space<vmem>>, vector<4x8x1xf32>
      tpu.vector_store %arg19[%c0_120, %c0_121, %c0_122], %166 {strides = array<i32>} : memref<4x8x1xf32, #tpu.memory_space<vmem>>, vector<4x8x1xf32>,
      %cst_123 = arith.constant 0.000000e+00 : f32
      %168 = vector.broadcast %cst_123 : f32 to vector<4x8x8xf32>
      %c0_124 = arith.constant 0 : index
      %c0_125 = arith.constant 0 : index
      %c0_126 = arith.constant 0 : index
      %169 = vector.load %arg20[%c0_124, %c0_125, %c0_126] : memref<4x8x8xf32, #tpu.memory_space<vmem>>, vector<4x8x8xf32>
      tpu.vector_store %arg20[%c0_124, %c0_125, %c0_126], %168 {strides = array<i32>} : memref<4x8x8xf32, #tpu.memory_space<vmem>>, vector<4x8x8xf32>,
      %c0_127 = arith.constant 0 : index
      %c0_128 = arith.constant 0 : index
      %c0_129 = arith.constant 0 : index
      %170 = vector.load %arg3[%c0_127, %c0_128, %c0_129] : memref<1x8x32xf32, #tpu.memory_space<vmem>>, vector<1x8x32xf32>
      %171 = vector.shape_cast %170 : vector<1x8x32xf32> to vector<8x32xf32>
      %c0_130 = arith.constant 0 : index
      %c0_131 = arith.constant 0 : index
      %c0_132 = arith.constant 0 : index
      %172 = vector.load %arg4[%c0_130, %c0_131, %c0_132] : memref<1x8x32xf32, #tpu.memory_space<vmem>>, vector<1x8x32xf32>
      %173 = vector.shape_cast %172 : vector<1x8x32xf32> to vector<8x32xf32>
      %174 = arith.addf %171, %173 : vector<8x32xf32>
      %c0_133 = arith.constant 0 : index
      %c0_134 = arith.constant 0 : index
      %175 = vector.load %arg7[%c0_133, %c0_134] : memref<32x32xf32, #tpu.memory_space<vmem>>, vector<32x32xf32>
      %cst_135 = arith.constant dense<0.000000e+00> : vector<8x32xf32>
      %176 = tpu.matmul %174, %175, %cst_135 {dimension_numbers = #tpu.dot_dimension_numbers<[1], [0], [0], [1], [0, 0, 1, 1], [], []>} : vector<8x32xf32>, vector<32x32xf32>, vector<8x32xf32> -> vector<8x32xf32>
      %c0_136 = arith.constant 0 : index
      %c0_137 = arith.constant 0 : index
      %177 = vector.load %arg11[%c0_136, %c0_137] : memref<1x32xf32, #tpu.memory_space<vmem>>, vector<1x32xf32>
      %178 = vector.broadcast %177 : vector<1x32xf32> to vector<8x32xf32>
      %179 = arith.addf %176, %178 : vector<8x32xf32>
      %180 = vector.extract_strided_slice %179 {offsets = [0, 0], sizes = [8, 8], strides = [1, 1]} : vector<8x32xf32> to vector<8x8xf32>
      %c0_138 = arith.constant 0 : index
      %c0_139 = arith.constant 0 : index
      %c0_140 = arith.constant 0 : index
      %181 = vector.load %arg17[%c0_138, %c0_139, %c0_140] : memref<4x8x8xf32, #tpu.memory_space<vmem>>, vector<1x8x8xf32>
      %182 = vector.shape_cast %181 : vector<1x8x8xf32> to vector<8x8xf32>
      %183 = vector.shape_cast %180 : vector<8x8xf32> to vector<1x8x8xf32>
      tpu.vector_store %arg17[%c0_138, %c0_139, %c0_140], %183 {strides = array<i32>} : memref<4x8x8xf32, #tpu.memory_space<vmem>>, vector<1x8x8xf32>,
      %184 = vector.extract_strided_slice %179 {offsets = [0, 8], sizes = [8, 8], strides = [1, 1]} : vector<8x32xf32> to vector<8x8xf32>
      %c1_141 = arith.constant 1 : index
      %c0_142 = arith.constant 0 : index
      %c0_143 = arith.constant 0 : index
      %185 = vector.load %arg17[%c1_141, %c0_142, %c0_143] : memref<4x8x8xf32, #tpu.memory_space<vmem>>, vector<1x8x8xf32>
      %186 = vector.shape_cast %185 : vector<1x8x8xf32> to vector<8x8xf32>
      %187 = vector.shape_cast %184 : vector<8x8xf32> to vector<1x8x8xf32>
      tpu.vector_store %arg17[%c1_141, %c0_142, %c0_143], %187 {strides = array<i32>} : memref<4x8x8xf32, #tpu.memory_space<vmem>>, vector<1x8x8xf32>,
      %188 = vector.extract_strided_slice %179 {offsets = [0, 16], sizes = [8, 8], strides = [1, 1]} : vector<8x32xf32> to vector<8x8xf32>
      %c2_144 = arith.constant 2 : index
      %c0_145 = arith.constant 0 : index
      %c0_146 = arith.constant 0 : index
      %189 = vector.load %arg17[%c2_144, %c0_145, %c0_146] : memref<4x8x8xf32, #tpu.memory_space<vmem>>, vector<1x8x8xf32>
      %190 = vector.shape_cast %189 : vector<1x8x8xf32> to vector<8x8xf32>
      %191 = vector.shape_cast %188 : vector<8x8xf32> to vector<1x8x8xf32>
      tpu.vector_store %arg17[%c2_144, %c0_145, %c0_146], %191 {strides = array<i32>} : memref<4x8x8xf32, #tpu.memory_space<vmem>>, vector<1x8x8xf32>,
      %192 = vector.extract_strided_slice %179 {offsets = [0, 24], sizes = [8, 8], strides = [1, 1]} : vector<8x32xf32> to vector<8x8xf32>
      %c3_147 = arith.constant 3 : index
      %c0_148 = arith.constant 0 : index
      %c0_149 = arith.constant 0 : index
      %193 = vector.load %arg17[%c3_147, %c0_148, %c0_149] : memref<4x8x8xf32, #tpu.memory_space<vmem>>, vector<1x8x8xf32>
      %194 = vector.shape_cast %193 : vector<1x8x8xf32> to vector<8x8xf32>
      %195 = vector.shape_cast %192 : vector<8x8xf32> to vector<1x8x8xf32>
      tpu.vector_store %arg17[%c3_147, %c0_148, %c0_149], %195 {strides = array<i32>} : memref<4x8x8xf32, #tpu.memory_space<vmem>>, vector<1x8x8xf32>,
    } else {
    }
    %c0 = arith.constant 0 : index
    %c0_1 = arith.constant 0 : index
    %c0_2 = arith.constant 0 : index
    %3 = vector.load %arg5[%c0, %c0_1, %c0_2] : memref<1x16x32xf32, #tpu.memory_space<vmem>>, vector<1x16x32xf32>
    %4 = vector.shape_cast %3 : vector<1x16x32xf32> to vector<16x32xf32>
    %c0_3 = arith.constant 0 : index
    %c0_4 = arith.constant 0 : index
    %c0_5 = arith.constant 0 : index
    %5 = vector.load %arg6[%c0_3, %c0_4, %c0_5] : memref<1x16x32xf32, #tpu.memory_space<vmem>>, vector<1x16x32xf32>
    %6 = vector.shape_cast %5 : vector<1x16x32xf32> to vector<16x32xf32>
    %7 = arith.addf %4, %6 : vector<16x32xf32>
    %c0_6 = arith.constant 0 : index
    %c0_7 = arith.constant 0 : index
    %8 = vector.load %arg8[%c0_6, %c0_7] : memref<32x32xf32, #tpu.memory_space<vmem>>, vector<32x32xf32>
    %cst = arith.constant dense<0.000000e+00> : vector<16x32xf32>
    %9 = tpu.matmul %7, %8, %cst {dimension_numbers = #tpu.dot_dimension_numbers<[1], [0], [0], [1], [0, 0, 1, 1], [], []>} : vector<16x32xf32>, vector<32x32xf32>, vector<16x32xf32> -> vector<16x32xf32>
    %c0_8 = arith.constant 0 : index
    %c0_9 = arith.constant 0 : index
    %c0_10 = arith.constant 0 : index
    %10 = vector.load %arg5[%c0_8, %c0_9, %c0_10] : memref<1x16x32xf32, #tpu.memory_space<vmem>>, vector<1x16x32xf32>
    %11 = vector.shape_cast %10 : vector<1x16x32xf32> to vector<16x32xf32>
    %c0_11 = arith.constant 0 : index
    %c0_12 = arith.constant 0 : index
    %12 = vector.load %arg9[%c0_11, %c0_12] : memref<32x32xf32, #tpu.memory_space<vmem>>, vector<32x32xf32>
    %cst_13 = arith.constant dense<0.000000e+00> : vector<16x32xf32>
    %13 = tpu.matmul %11, %12, %cst_13 {dimension_numbers = #tpu.dot_dimension_numbers<[1], [0], [0], [1], [0, 0, 1, 1], [], []>} : vector<16x32xf32>, vector<32x32xf32>, vector<16x32xf32> -> vector<16x32xf32>
    %c0_14 = arith.constant 0 : index
    %c0_15 = arith.constant 0 : index
    %14 = vector.load %arg12[%c0_14, %c0_15] : memref<1x32xf32, #tpu.memory_space<vmem>>, vector<1x32xf32>
    %15 = vector.broadcast %14 : vector<1x32xf32> to vector<16x32xf32>
    %16 = arith.addf %13, %15 : vector<16x32xf32>
    %c0_16 = arith.constant 0 : index
    %c0_17 = arith.constant 0 : index
    %c0_18 = arith.constant 0 : index
    %17 = vector.load %arg17[%c0_16, %c0_17, %c0_18] : memref<4x8x8xf32, #tpu.memory_space<vmem>>, vector<1x8x8xf32>
    %18 = vector.shape_cast %17 : vector<1x8x8xf32> to vector<8x8xf32>
    %19 = vector.extract_strided_slice %9 {offsets = [0, 0], sizes = [16, 8], strides = [1, 1]} : vector<16x32xf32> to vector<16x8xf32>
    %20 = vector.extract_strided_slice %16 {offsets = [0, 0], sizes = [16, 8], strides = [1, 1]} : vector<16x32xf32> to vector<16x8xf32>
    %cst_19 = arith.constant dense<0.000000e+00> : vector<8x16xf32>
    %21 = tpu.matmul %18, %19, %cst_19 {dimension_numbers = #tpu.dot_dimension_numbers<[1], [1], [0], [0], [0, 0, 1, 0], [], []>} : vector<8x8xf32>, vector<16x8xf32>, vector<8x16xf32> -> vector<8x16xf32>
    %c0_20 = arith.constant 0 : index
    %c0_21 = arith.constant 0 : index
    %c0_22 = arith.constant 0 : index
    %22 = vector.load %arg18[%c0_20, %c0_21, %c0_22] : memref<4x8x1xf32, #tpu.memory_space<vmem>>, vector<1x8x1xf32>
    %23 = vector.shape_cast %22 : vector<1x8x1xf32> to vector<8x1xf32>
    %cst_23 = arith.constant dense<0xFF800000> : vector<8xf32>
    %24 = vector.multi_reduction <maximumf>, %21, %cst_23 [1] : vector<8x16xf32> to vector<8xf32>
    %25 = vector.shape_cast %24 : vector<8xf32> to vector<8x1xf32>
    %26 = arith.maximumf %23, %25 : vector<8x1xf32>
    %27 = arith.subf %23, %26 : vector<8x1xf32>
    %28 = math.exp %27 : vector<8x1xf32>
    %29 = vector.broadcast %26 : vector<8x1xf32> to vector<8x16xf32>
    %30 = arith.subf %21, %29 : vector<8x16xf32>
    %31 = math.exp %30 : vector<8x16xf32>
    %c0_24 = arith.constant 0 : index
    %c0_25 = arith.constant 0 : index
    %c0_26 = arith.constant 0 : index
    %32 = vector.load %arg19[%c0_24, %c0_25, %c0_26] : memref<4x8x1xf32, #tpu.memory_space<vmem>>, vector<1x8x1xf32>
    %33 = vector.shape_cast %32 : vector<1x8x1xf32> to vector<8x1xf32>
    %34 = arith.mulf %28, %33 : vector<8x1xf32>
    %cst_27 = arith.constant dense<0.000000e+00> : vector<8xf32>
    %35 = vector.multi_reduction <add>, %31, %cst_27 [1] : vector<8x16xf32> to vector<8xf32>
    %36 = vector.shape_cast %35 : vector<8xf32> to vector<8x1xf32>
    %37 = arith.addf %34, %36 : vector<8x1xf32>
    %c0_28 = arith.constant 0 : index
    %c0_29 = arith.constant 0 : index
    %c0_30 = arith.constant 0 : index
    %38 = vector.load %arg19[%c0_28, %c0_29, %c0_30] : memref<4x8x1xf32, #tpu.memory_space<vmem>>, vector<1x8x1xf32>
    %39 = vector.shape_cast %38 : vector<1x8x1xf32> to vector<8x1xf32>
    %40 = vector.shape_cast %37 : vector<8x1xf32> to vector<1x8x1xf32>
    tpu.vector_store %arg19[%c0_28, %c0_29, %c0_30], %40 {strides = array<i32>} : memref<4x8x1xf32, #tpu.memory_space<vmem>>, vector<1x8x1xf32>,
    %c0_31 = arith.constant 0 : index
    %c0_32 = arith.constant 0 : index
    %c0_33 = arith.constant 0 : index
    %41 = vector.load %arg20[%c0_31, %c0_32, %c0_33] : memref<4x8x8xf32, #tpu.memory_space<vmem>>, vector<1x8x8xf32>
    %42 = vector.shape_cast %41 : vector<1x8x8xf32> to vector<8x8xf32>
    %43 = vector.broadcast %28 : vector<8x1xf32> to vector<8x8xf32>
    %44 = arith.mulf %43, %42 : vector<8x8xf32>
    %cst_34 = arith.constant dense<0.000000e+00> : vector<8x8xf32>
    %45 = tpu.matmul %31, %20, %cst_34 {dimension_numbers = #tpu.dot_dimension_numbers<[1], [0], [0], [1], [0, 0, 1, 1], [], []>} : vector<8x16xf32>, vector<16x8xf32>, vector<8x8xf32> -> vector<8x8xf32>
    %46 = arith.addf %44, %45 : vector<8x8xf32>
    %c0_35 = arith.constant 0 : index
    %c0_36 = arith.constant 0 : index
    %c0_37 = arith.constant 0 : index
    %47 = vector.load %arg20[%c0_35, %c0_36, %c0_37] : memref<4x8x8xf32, #tpu.memory_space<vmem>>, vector<1x8x8xf32>
    %48 = vector.shape_cast %47 : vector<1x8x8xf32> to vector<8x8xf32>
    %49 = vector.shape_cast %46 : vector<8x8xf32> to vector<1x8x8xf32>
    tpu.vector_store %arg20[%c0_35, %c0_36, %c0_37], %49 {strides = array<i32>} : memref<4x8x8xf32, #tpu.memory_space<vmem>>, vector<1x8x8xf32>,
    %c0_38 = arith.constant 0 : index
    %c0_39 = arith.constant 0 : index
    %c0_40 = arith.constant 0 : index
    %50 = vector.load %arg18[%c0_38, %c0_39, %c0_40] : memref<4x8x1xf32, #tpu.memory_space<vmem>>, vector<1x8x1xf32>
    %51 = vector.shape_cast %50 : vector<1x8x1xf32> to vector<8x1xf32>
    %52 = vector.shape_cast %26 : vector<8x1xf32> to vector<1x8x1xf32>
    tpu.vector_store %arg18[%c0_38, %c0_39, %c0_40], %52 {strides = array<i32>} : memref<4x8x1xf32, #tpu.memory_space<vmem>>, vector<1x8x1xf32>,
    %c1 = arith.constant 1 : index
    %c0_41 = arith.constant 0 : index
    %c0_42 = arith.constant 0 : index
    %53 = vector.load %arg17[%c1, %c0_41, %c0_42] : memref<4x8x8xf32, #tpu.memory_space<vmem>>, vector<1x8x8xf32>
    %54 = vector.shape_cast %53 : vector<1x8x8xf32> to vector<8x8xf32>
    %55 = vector.extract_strided_slice %9 {offsets = [0, 8], sizes = [16, 8], strides = [1, 1]} : vector<16x32xf32> to vector<16x8xf32>
    %56 = vector.extract_strided_slice %16 {offsets = [0, 8], sizes = [16, 8], strides = [1, 1]} : vector<16x32xf32> to vector<16x8xf32>
    %cst_43 = arith.constant dense<0.000000e+00> : vector<8x16xf32>
    %57 = tpu.matmul %54, %55, %cst_43 {dimension_numbers = #tpu.dot_dimension_numbers<[1], [1], [0], [0], [0, 0, 1, 0], [], []>} : vector<8x8xf32>, vector<16x8xf32>, vector<8x16xf32> -> vector<8x16xf32>
    %c1_44 = arith.constant 1 : index
    %c0_45 = arith.constant 0 : index
    %c0_46 = arith.constant 0 : index
    %58 = vector.load %arg18[%c1_44, %c0_45, %c0_46] : memref<4x8x1xf32, #tpu.memory_space<vmem>>, vector<1x8x1xf32>
    %59 = vector.shape_cast %58 : vector<1x8x1xf32> to vector<8x1xf32>
    %cst_47 = arith.constant dense<0xFF800000> : vector<8xf32>
    %60 = vector.multi_reduction <maximumf>, %57, %cst_47 [1] : vector<8x16xf32> to vector<8xf32>
    %61 = vector.shape_cast %60 : vector<8xf32> to vector<8x1xf32>
    %62 = arith.maximumf %59, %61 : vector<8x1xf32>
    %63 = arith.subf %59, %62 : vector<8x1xf32>
    %64 = math.exp %63 : vector<8x1xf32>
    %65 = vector.broadcast %62 : vector<8x1xf32> to vector<8x16xf32>
    %66 = arith.subf %57, %65 : vector<8x16xf32>
    %67 = math.exp %66 : vector<8x16xf32>
    %c1_48 = arith.constant 1 : index
    %c0_49 = arith.constant 0 : index
    %c0_50 = arith.constant 0 : index
    %68 = vector.load %arg19[%c1_48, %c0_49, %c0_50] : memref<4x8x1xf32, #tpu.memory_space<vmem>>, vector<1x8x1xf32>
    %69 = vector.shape_cast %68 : vector<1x8x1xf32> to vector<8x1xf32>
    %70 = arith.mulf %64, %69 : vector<8x1xf32>
    %cst_51 = arith.constant dense<0.000000e+00> : vector<8xf32>
    %71 = vector.multi_reduction <add>, %67, %cst_51 [1] : vector<8x16xf32> to vector<8xf32>
    %72 = vector.shape_cast %71 : vector<8xf32> to vector<8x1xf32>
    %73 = arith.addf %70, %72 : vector<8x1xf32>
    %c1_52 = arith.constant 1 : index
    %c0_53 = arith.constant 0 : index
    %c0_54 = arith.constant 0 : index
    %74 = vector.load %arg19[%c1_52, %c0_53, %c0_54] : memref<4x8x1xf32, #tpu.memory_space<vmem>>, vector<1x8x1xf32>
    %75 = vector.shape_cast %74 : vector<1x8x1xf32> to vector<8x1xf32>
    %76 = vector.shape_cast %73 : vector<8x1xf32> to vector<1x8x1xf32>
    tpu.vector_store %arg19[%c1_52, %c0_53, %c0_54], %76 {strides = array<i32>} : memref<4x8x1xf32, #tpu.memory_space<vmem>>, vector<1x8x1xf32>,
    %c1_55 = arith.constant 1 : index
    %c0_56 = arith.constant 0 : index
    %c0_57 = arith.constant 0 : index
    %77 = vector.load %arg20[%c1_55, %c0_56, %c0_57] : memref<4x8x8xf32, #tpu.memory_space<vmem>>, vector<1x8x8xf32>
    %78 = vector.shape_cast %77 : vector<1x8x8xf32> to vector<8x8xf32>
    %79 = vector.broadcast %64 : vector<8x1xf32> to vector<8x8xf32>
    %80 = arith.mulf %79, %78 : vector<8x8xf32>
    %cst_58 = arith.constant dense<0.000000e+00> : vector<8x8xf32>
    %81 = tpu.matmul %67, %56, %cst_58 {dimension_numbers = #tpu.dot_dimension_numbers<[1], [0], [0], [1], [0, 0, 1, 1], [], []>} : vector<8x16xf32>, vector<16x8xf32>, vector<8x8xf32> -> vector<8x8xf32>
    %82 = arith.addf %80, %81 : vector<8x8xf32>
    %c1_59 = arith.constant 1 : index
    %c0_60 = arith.constant 0 : index
    %c0_61 = arith.constant 0 : index
    %83 = vector.load %arg20[%c1_59, %c0_60, %c0_61] : memref<4x8x8xf32, #tpu.memory_space<vmem>>, vector<1x8x8xf32>
    %84 = vector.shape_cast %83 : vector<1x8x8xf32> to vector<8x8xf32>
    %85 = vector.shape_cast %82 : vector<8x8xf32> to vector<1x8x8xf32>
    tpu.vector_store %arg20[%c1_59, %c0_60, %c0_61], %85 {strides = array<i32>} : memref<4x8x8xf32, #tpu.memory_space<vmem>>, vector<1x8x8xf32>,
    %c1_62 = arith.constant 1 : index
    %c0_63 = arith.constant 0 : index
    %c0_64 = arith.constant 0 : index
    %86 = vector.load %arg18[%c1_62, %c0_63, %c0_64] : memref<4x8x1xf32, #tpu.memory_space<vmem>>, vector<1x8x1xf32>
    %87 = vector.shape_cast %86 : vector<1x8x1xf32> to vector<8x1xf32>
    %88 = vector.shape_cast %62 : vector<8x1xf32> to vector<1x8x1xf32>
    tpu.vector_store %arg18[%c1_62, %c0_63, %c0_64], %88 {strides = array<i32>} : memref<4x8x1xf32, #tpu.memory_space<vmem>>, vector<1x8x1xf32>,
    %c2 = arith.constant 2 : index
    %c0_65 = arith.constant 0 : index
    %c0_66 = arith.constant 0 : index
    %89 = vector.load %arg17[%c2, %c0_65, %c0_66] : memref<4x8x8xf32, #tpu.memory_space<vmem>>, vector<1x8x8xf32>
    %90 = vector.shape_cast %89 : vector<1x8x8xf32> to vector<8x8xf32>
    %91 = vector.extract_strided_slice %9 {offsets = [0, 16], sizes = [16, 8], strides = [1, 1]} : vector<16x32xf32> to vector<16x8xf32>
    %92 = vector.extract_strided_slice %16 {offsets = [0, 16], sizes = [16, 8], strides = [1, 1]} : vector<16x32xf32> to vector<16x8xf32>
    %cst_67 = arith.constant dense<0.000000e+00> : vector<8x16xf32>
    %93 = tpu.matmul %90, %91, %cst_67 {dimension_numbers = #tpu.dot_dimension_numbers<[1], [1], [0], [0], [0, 0, 1, 0], [], []>} : vector<8x8xf32>, vector<16x8xf32>, vector<8x16xf32> -> vector<8x16xf32>
    %c2_68 = arith.constant 2 : index
    %c0_69 = arith.constant 0 : index
    %c0_70 = arith.constant 0 : index
    %94 = vector.load %arg18[%c2_68, %c0_69, %c0_70] : memref<4x8x1xf32, #tpu.memory_space<vmem>>, vector<1x8x1xf32>
    %95 = vector.shape_cast %94 : vector<1x8x1xf32> to vector<8x1xf32>
    %cst_71 = arith.constant dense<0xFF800000> : vector<8xf32>
    %96 = vector.multi_reduction <maximumf>, %93, %cst_71 [1] : vector<8x16xf32> to vector<8xf32>
    %97 = vector.shape_cast %96 : vector<8xf32> to vector<8x1xf32>
    %98 = arith.maximumf %95, %97 : vector<8x1xf32>
    %99 = arith.subf %95, %98 : vector<8x1xf32>
    %100 = math.exp %99 : vector<8x1xf32>
    %101 = vector.broadcast %98 : vector<8x1xf32> to vector<8x16xf32>
    %102 = arith.subf %93, %101 : vector<8x16xf32>
    %103 = math.exp %102 : vector<8x16xf32>
    %c2_72 = arith.constant 2 : index
    %c0_73 = arith.constant 0 : index
    %c0_74 = arith.constant 0 : index
    %104 = vector.load %arg19[%c2_72, %c0_73, %c0_74] : memref<4x8x1xf32, #tpu.memory_space<vmem>>, vector<1x8x1xf32>
    %105 = vector.shape_cast %104 : vector<1x8x1xf32> to vector<8x1xf32>
    %106 = arith.mulf %100, %105 : vector<8x1xf32>
    %cst_75 = arith.constant dense<0.000000e+00> : vector<8xf32>
    %107 = vector.multi_reduction <add>, %103, %cst_75 [1] : vector<8x16xf32> to vector<8xf32>
    %108 = vector.shape_cast %107 : vector<8xf32> to vector<8x1xf32>
    %109 = arith.addf %106, %108 : vector<8x1xf32>
    %c2_76 = arith.constant 2 : index
    %c0_77 = arith.constant 0 : index
    %c0_78 = arith.constant 0 : index
    %110 = vector.load %arg19[%c2_76, %c0_77, %c0_78] : memref<4x8x1xf32, #tpu.memory_space<vmem>>, vector<1x8x1xf32>
    %111 = vector.shape_cast %110 : vector<1x8x1xf32> to vector<8x1xf32>
    %112 = vector.shape_cast %109 : vector<8x1xf32> to vector<1x8x1xf32>
    tpu.vector_store %arg19[%c2_76, %c0_77, %c0_78], %112 {strides = array<i32>} : memref<4x8x1xf32, #tpu.memory_space<vmem>>, vector<1x8x1xf32>,
    %c2_79 = arith.constant 2 : index
    %c0_80 = arith.constant 0 : index
    %c0_81 = arith.constant 0 : index
    %113 = vector.load %arg20[%c2_79, %c0_80, %c0_81] : memref<4x8x8xf32, #tpu.memory_space<vmem>>, vector<1x8x8xf32>
    %114 = vector.shape_cast %113 : vector<1x8x8xf32> to vector<8x8xf32>
    %115 = vector.broadcast %100 : vector<8x1xf32> to vector<8x8xf32>
    %116 = arith.mulf %115, %114 : vector<8x8xf32>
    %cst_82 = arith.constant dense<0.000000e+00> : vector<8x8xf32>
    %117 = tpu.matmul %103, %92, %cst_82 {dimension_numbers = #tpu.dot_dimension_numbers<[1], [0], [0], [1], [0, 0, 1, 1], [], []>} : vector<8x16xf32>, vector<16x8xf32>, vector<8x8xf32> -> vector<8x8xf32>
    %118 = arith.addf %116, %117 : vector<8x8xf32>
    %c2_83 = arith.constant 2 : index
    %c0_84 = arith.constant 0 : index
    %c0_85 = arith.constant 0 : index
    %119 = vector.load %arg20[%c2_83, %c0_84, %c0_85] : memref<4x8x8xf32, #tpu.memory_space<vmem>>, vector<1x8x8xf32>
    %120 = vector.shape_cast %119 : vector<1x8x8xf32> to vector<8x8xf32>
    %121 = vector.shape_cast %118 : vector<8x8xf32> to vector<1x8x8xf32>
    tpu.vector_store %arg20[%c2_83, %c0_84, %c0_85], %121 {strides = array<i32>} : memref<4x8x8xf32, #tpu.memory_space<vmem>>, vector<1x8x8xf32>,
    %c2_86 = arith.constant 2 : index
    %c0_87 = arith.constant 0 : index
    %c0_88 = arith.constant 0 : index
    %122 = vector.load %arg18[%c2_86, %c0_87, %c0_88] : memref<4x8x1xf32, #tpu.memory_space<vmem>>, vector<1x8x1xf32>
    %123 = vector.shape_cast %122 : vector<1x8x1xf32> to vector<8x1xf32>
    %124 = vector.shape_cast %98 : vector<8x1xf32> to vector<1x8x1xf32>
    tpu.vector_store %arg18[%c2_86, %c0_87, %c0_88], %124 {strides = array<i32>} : memref<4x8x1xf32, #tpu.memory_space<vmem>>, vector<1x8x1xf32>,
    %c3 = arith.constant 3 : index
    %c0_89 = arith.constant 0 : index
    %c0_90 = arith.constant 0 : index
    %125 = vector.load %arg17[%c3, %c0_89, %c0_90] : memref<4x8x8xf32, #tpu.memory_space<vmem>>, vector<1x8x8xf32>
    %126 = vector.shape_cast %125 : vector<1x8x8xf32> to vector<8x8xf32>
    %127 = vector.extract_strided_slice %9 {offsets = [0, 24], sizes = [16, 8], strides = [1, 1]} : vector<16x32xf32> to vector<16x8xf32>
    %128 = vector.extract_strided_slice %16 {offsets = [0, 24], sizes = [16, 8], strides = [1, 1]} : vector<16x32xf32> to vector<16x8xf32>
    %cst_91 = arith.constant dense<0.000000e+00> : vector<8x16xf32>
    %129 = tpu.matmul %126, %127, %cst_91 {dimension_numbers = #tpu.dot_dimension_numbers<[1], [1], [0], [0], [0, 0, 1, 0], [], []>} : vector<8x8xf32>, vector<16x8xf32>, vector<8x16xf32> -> vector<8x16xf32>
    %c3_92 = arith.constant 3 : index
    %c0_93 = arith.constant 0 : index
    %c0_94 = arith.constant 0 : index
    %130 = vector.load %arg18[%c3_92, %c0_93, %c0_94] : memref<4x8x1xf32, #tpu.memory_space<vmem>>, vector<1x8x1xf32>
    %131 = vector.shape_cast %130 : vector<1x8x1xf32> to vector<8x1xf32>
    %cst_95 = arith.constant dense<0xFF800000> : vector<8xf32>
    %132 = vector.multi_reduction <maximumf>, %129, %cst_95 [1] : vector<8x16xf32> to vector<8xf32>
    %133 = vector.shape_cast %132 : vector<8xf32> to vector<8x1xf32>
    %134 = arith.maximumf %131, %133 : vector<8x1xf32>
    %135 = arith.subf %131, %134 : vector<8x1xf32>
    %136 = math.exp %135 : vector<8x1xf32>
    %137 = vector.broadcast %134 : vector<8x1xf32> to vector<8x16xf32>
    %138 = arith.subf %129, %137 : vector<8x16xf32>
    %139 = math.exp %138 : vector<8x16xf32>
    %c3_96 = arith.constant 3 : index
    %c0_97 = arith.constant 0 : index
    %c0_98 = arith.constant 0 : index
    %140 = vector.load %arg19[%c3_96, %c0_97, %c0_98] : memref<4x8x1xf32, #tpu.memory_space<vmem>>, vector<1x8x1xf32>
    %141 = vector.shape_cast %140 : vector<1x8x1xf32> to vector<8x1xf32>
    %142 = arith.mulf %136, %141 : vector<8x1xf32>
    %cst_99 = arith.constant dense<0.000000e+00> : vector<8xf32>
    %143 = vector.multi_reduction <add>, %139, %cst_99 [1] : vector<8x16xf32> to vector<8xf32>
    %144 = vector.shape_cast %143 : vector<8xf32> to vector<8x1xf32>
    %145 = arith.addf %142, %144 : vector<8x1xf32>
    %c3_100 = arith.constant 3 : index
    %c0_101 = arith.constant 0 : index
    %c0_102 = arith.constant 0 : index
    %146 = vector.load %arg19[%c3_100, %c0_101, %c0_102] : memref<4x8x1xf32, #tpu.memory_space<vmem>>, vector<1x8x1xf32>
    %147 = vector.shape_cast %146 : vector<1x8x1xf32> to vector<8x1xf32>
    %148 = vector.shape_cast %145 : vector<8x1xf32> to vector<1x8x1xf32>
    tpu.vector_store %arg19[%c3_100, %c0_101, %c0_102], %148 {strides = array<i32>} : memref<4x8x1xf32, #tpu.memory_space<vmem>>, vector<1x8x1xf32>,
    %c3_103 = arith.constant 3 : index
    %c0_104 = arith.constant 0 : index
    %c0_105 = arith.constant 0 : index
    %149 = vector.load %arg20[%c3_103, %c0_104, %c0_105] : memref<4x8x8xf32, #tpu.memory_space<vmem>>, vector<1x8x8xf32>
    %150 = vector.shape_cast %149 : vector<1x8x8xf32> to vector<8x8xf32>
    %151 = vector.broadcast %136 : vector<8x1xf32> to vector<8x8xf32>
    %152 = arith.mulf %151, %150 : vector<8x8xf32>
    %cst_106 = arith.constant dense<0.000000e+00> : vector<8x8xf32>
    %153 = tpu.matmul %139, %128, %cst_106 {dimension_numbers = #tpu.dot_dimension_numbers<[1], [0], [0], [1], [0, 0, 1, 1], [], []>} : vector<8x16xf32>, vector<16x8xf32>, vector<8x8xf32> -> vector<8x8xf32>
    %154 = arith.addf %152, %153 : vector<8x8xf32>
    %c3_107 = arith.constant 3 : index
    %c0_108 = arith.constant 0 : index
    %c0_109 = arith.constant 0 : index
    %155 = vector.load %arg20[%c3_107, %c0_108, %c0_109] : memref<4x8x8xf32, #tpu.memory_space<vmem>>, vector<1x8x8xf32>
    %156 = vector.shape_cast %155 : vector<1x8x8xf32> to vector<8x8xf32>
    %157 = vector.shape_cast %154 : vector<8x8xf32> to vector<1x8x8xf32>
    tpu.vector_store %arg20[%c3_107, %c0_108, %c0_109], %157 {strides = array<i32>} : memref<4x8x8xf32, #tpu.memory_space<vmem>>, vector<1x8x8xf32>,
    %c3_110 = arith.constant 3 : index
    %c0_111 = arith.constant 0 : index
    %c0_112 = arith.constant 0 : index
    %158 = vector.load %arg18[%c3_110, %c0_111, %c0_112] : memref<4x8x1xf32, #tpu.memory_space<vmem>>, vector<1x8x1xf32>
    %159 = vector.shape_cast %158 : vector<1x8x1xf32> to vector<8x1xf32>
    %160 = vector.shape_cast %134 : vector<8x1xf32> to vector<1x8x1xf32>
    tpu.vector_store %arg18[%c3_110, %c0_111, %c0_112], %160 {strides = array<i32>} : memref<4x8x1xf32, #tpu.memory_space<vmem>>, vector<1x8x1xf32>,
    %c0_i32_113 = arith.constant 0 : i32
    %161 = arith.cmpi eq, %arg2, %c0_i32_113 : i32
    %162 = arith.extui %161 : i1 to i32
    %c0_i32_114 = arith.constant 0 : i32
    %163 = arith.cmpi ne, %162, %c0_i32_114 : i32
    scf.if %163 {
      %c0_115 = arith.constant 0 : index
      %c0_116 = arith.constant 0 : index
      %164 = vector.load %arg13[%c0_115, %c0_116] : memref<1x32xf32, #tpu.memory_space<vmem>>, vector<1x32xf32>
      %c0_117 = arith.constant 0 : index
      %c0_118 = arith.constant 0 : index
      %c0_119 = arith.constant 0 : index
      %165 = vector.load %arg19[%c0_117, %c0_118, %c0_119] : memref<4x8x1xf32, #tpu.memory_space<vmem>>, vector<1x8x1xf32>
      %166 = vector.shape_cast %165 : vector<1x8x1xf32> to vector<8x1xf32>
      %167 = tpu.reciprocal %166 : vector<8x1xf32> -> vector<8x1xf32>
      %c0_120 = arith.constant 0 : index
      %c0_121 = arith.constant 0 : index
      %c0_122 = arith.constant 0 : index
      %168 = vector.load %arg20[%c0_120, %c0_121, %c0_122] : memref<4x8x8xf32, #tpu.memory_space<vmem>>, vector<1x8x8xf32>
      %169 = vector.shape_cast %168 : vector<1x8x8xf32> to vector<8x8xf32>
      %170 = vector.broadcast %167 : vector<8x1xf32> to vector<8x8xf32>
      %171 = arith.mulf %169, %170 : vector<8x8xf32>
      %c0_123 = arith.constant 0 : index
      %c0_124 = arith.constant 0 : index
      %c0_125 = arith.constant 0 : index
      %172 = vector.load %arg10[%c0_123, %c0_124, %c0_125] : memref<4x8x32xf32, #tpu.memory_space<vmem>>, vector<1x8x32xf32>
      %173 = vector.shape_cast %172 : vector<1x8x32xf32> to vector<8x32xf32>
      %cst_126 = arith.constant dense<0.000000e+00> : vector<8x32xf32>
      %174 = tpu.matmul %171, %173, %cst_126 {dimension_numbers = #tpu.dot_dimension_numbers<[1], [0], [0], [1], [0, 0, 1, 1], [], []>} : vector<8x8xf32>, vector<8x32xf32>, vector<8x32xf32> -> vector<8x32xf32>
      %175 = vector.broadcast %164 : vector<1x32xf32> to vector<8x32xf32>
      %176 = arith.addf %175, %174 : vector<8x32xf32>
      %c1_127 = arith.constant 1 : index
      %c0_128 = arith.constant 0 : index
      %c0_129 = arith.constant 0 : index
      %177 = vector.load %arg19[%c1_127, %c0_128, %c0_129] : memref<4x8x1xf32, #tpu.memory_space<vmem>>, vector<1x8x1xf32>
      %178 = vector.shape_cast %177 : vector<1x8x1xf32> to vector<8x1xf32>
      %179 = tpu.reciprocal %178 : vector<8x1xf32> -> vector<8x1xf32>
      %c1_130 = arith.constant 1 : index
      %c0_131 = arith.constant 0 : index
      %c0_132 = arith.constant 0 : index
      %180 = vector.load %arg20[%c1_130, %c0_131, %c0_132] : memref<4x8x8xf32, #tpu.memory_space<vmem>>, vector<1x8x8xf32>
      %181 = vector.shape_cast %180 : vector<1x8x8xf32> to vector<8x8xf32>
      %182 = vector.broadcast %179 : vector<8x1xf32> to vector<8x8xf32>
      %183 = arith.mulf %181, %182 : vector<8x8xf32>
      %c1_133 = arith.constant 1 : index
      %c0_134 = arith.constant 0 : index
      %c0_135 = arith.constant 0 : index
      %184 = vector.load %arg10[%c1_133, %c0_134, %c0_135] : memref<4x8x32xf32, #tpu.memory_space<vmem>>, vector<1x8x32xf32>
      %185 = vector.shape_cast %184 : vector<1x8x32xf32> to vector<8x32xf32>
      %cst_136 = arith.constant dense<0.000000e+00> : vector<8x32xf32>
      %186 = tpu.matmul %183, %185, %cst_136 {dimension_numbers = #tpu.dot_dimension_numbers<[1], [0], [0], [1], [0, 0, 1, 1], [], []>} : vector<8x8xf32>, vector<8x32xf32>, vector<8x32xf32> -> vector<8x32xf32>
      %187 = arith.addf %176, %186 : vector<8x32xf32>
      %c2_137 = arith.constant 2 : index
      %c0_138 = arith.constant 0 : index
      %c0_139 = arith.constant 0 : index
      %188 = vector.load %arg19[%c2_137, %c0_138, %c0_139] : memref<4x8x1xf32, #tpu.memory_space<vmem>>, vector<1x8x1xf32>
      %189 = vector.shape_cast %188 : vector<1x8x1xf32> to vector<8x1xf32>
      %190 = tpu.reciprocal %189 : vector<8x1xf32> -> vector<8x1xf32>
      %c2_140 = arith.constant 2 : index
      %c0_141 = arith.constant 0 : index
      %c0_142 = arith.constant 0 : index
      %191 = vector.load %arg20[%c2_140, %c0_141, %c0_142] : memref<4x8x8xf32, #tpu.memory_space<vmem>>, vector<1x8x8xf32>
      %192 = vector.shape_cast %191 : vector<1x8x8xf32> to vector<8x8xf32>
      %193 = vector.broadcast %190 : vector<8x1xf32> to vector<8x8xf32>
      %194 = arith.mulf %192, %193 : vector<8x8xf32>
      %c2_143 = arith.constant 2 : index
      %c0_144 = arith.constant 0 : index
      %c0_145 = arith.constant 0 : index
      %195 = vector.load %arg10[%c2_143, %c0_144, %c0_145] : memref<4x8x32xf32, #tpu.memory_space<vmem>>, vector<1x8x32xf32>
      %196 = vector.shape_cast %195 : vector<1x8x32xf32> to vector<8x32xf32>
      %cst_146 = arith.constant dense<0.000000e+00> : vector<8x32xf32>
      %197 = tpu.matmul %194, %196, %cst_146 {dimension_numbers = #tpu.dot_dimension_numbers<[1], [0], [0], [1], [0, 0, 1, 1], [], []>} : vector<8x8xf32>, vector<8x32xf32>, vector<8x32xf32> -> vector<8x32xf32>
      %198 = arith.addf %187, %197 : vector<8x32xf32>
      %c3_147 = arith.constant 3 : index
      %c0_148 = arith.constant 0 : index
      %c0_149 = arith.constant 0 : index
      %199 = vector.load %arg19[%c3_147, %c0_148, %c0_149] : memref<4x8x1xf32, #tpu.memory_space<vmem>>, vector<1x8x1xf32>
      %200 = vector.shape_cast %199 : vector<1x8x1xf32> to vector<8x1xf32>
      %201 = tpu.reciprocal %200 : vector<8x1xf32> -> vector<8x1xf32>
      %c3_150 = arith.constant 3 : index
      %c0_151 = arith.constant 0 : index
      %c0_152 = arith.constant 0 : index
      %202 = vector.load %arg20[%c3_150, %c0_151, %c0_152] : memref<4x8x8xf32, #tpu.memory_space<vmem>>, vector<1x8x8xf32>
      %203 = vector.shape_cast %202 : vector<1x8x8xf32> to vector<8x8xf32>
      %204 = vector.broadcast %201 : vector<8x1xf32> to vector<8x8xf32>
      %205 = arith.mulf %203, %204 : vector<8x8xf32>
      %c3_153 = arith.constant 3 : index
      %c0_154 = arith.constant 0 : index
      %c0_155 = arith.constant 0 : index
      %206 = vector.load %arg10[%c3_153, %c0_154, %c0_155] : memref<4x8x32xf32, #tpu.memory_space<vmem>>, vector<1x8x32xf32>
      %207 = vector.shape_cast %206 : vector<1x8x32xf32> to vector<8x32xf32>
      %cst_156 = arith.constant dense<0.000000e+00> : vector<8x32xf32>
      %208 = tpu.matmul %205, %207, %cst_156 {dimension_numbers = #tpu.dot_dimension_numbers<[1], [0], [0], [1], [0, 0, 1, 1], [], []>} : vector<8x8xf32>, vector<8x32xf32>, vector<8x32xf32> -> vector<8x32xf32>
      %209 = arith.addf %198, %208 : vector<8x32xf32>
      %c0_157 = arith.constant 0 : index
      %c0_158 = arith.constant 0 : index
      %c0_159 = arith.constant 0 : index
      %210 = vector.load %arg3[%c0_157, %c0_158, %c0_159] : memref<1x8x32xf32, #tpu.memory_space<vmem>>, vector<1x8x32xf32>
      %211 = vector.shape_cast %210 : vector<1x8x32xf32> to vector<8x32xf32>
      %212 = arith.addf %211, %209 : vector<8x32xf32>
      %cst_160 = arith.constant dense<0.000000e+00> : vector<8xf32>
      %213 = vector.multi_reduction <add>, %212, %cst_160 [1] : vector<8x32xf32> to vector<8xf32>
      %214 = vector.shape_cast %213 : vector<8xf32> to vector<8x1xf32>
      %cst_161 = arith.constant 3.200000e+01 : f32
      %215 = vector.broadcast %cst_161 : f32 to vector<8x1xf32>
      %216 = arith.divf %214, %215 : vector<8x1xf32>
      %217 = vector.broadcast %216 : vector<8x1xf32> to vector<8x32xf32>
      %218 = arith.subf %212, %217 : vector<8x32xf32>
      %219 = arith.mulf %218, %218 : vector<8x32xf32>
      %cst_162 = arith.constant dense<0.000000e+00> : vector<8xf32>
      %220 = vector.multi_reduction <add>, %219, %cst_162 [1] : vector<8x32xf32> to vector<8xf32>
      %221 = vector.shape_cast %220 : vector<8xf32> to vector<8x1xf32>
      %cst_163 = arith.constant 3.200000e+01 : f32
      %222 = vector.broadcast %cst_163 : f32 to vector<8x1xf32>
      %223 = arith.divf %221, %222 : vector<8x1xf32>
      %cst_164 = arith.constant 9.99999974E-6 : f32
      %224 = vector.broadcast %cst_164 : f32 to vector<8x1xf32>
      %225 = arith.addf %223, %224 : vector<8x1xf32>
      %226 = math.rsqrt %225 : vector<8x1xf32>
      %227 = vector.broadcast %226 : vector<8x1xf32> to vector<8x32xf32>
      %228 = arith.mulf %218, %227 : vector<8x32xf32>
      %c0_165 = arith.constant 0 : index
      %c0_166 = arith.constant 0 : index
      %229 = vector.load %arg14[%c0_165, %c0_166] : memref<1x32xf32, #tpu.memory_space<vmem>>, vector<1x32xf32>
      %230 = vector.broadcast %229 : vector<1x32xf32> to vector<8x32xf32>
      %231 = arith.mulf %228, %230 : vector<8x32xf32>
      %c0_167 = arith.constant 0 : index
      %c0_168 = arith.constant 0 : index
      %232 = vector.load %arg15[%c0_167, %c0_168] : memref<1x32xf32, #tpu.memory_space<vmem>>, vector<1x32xf32>
      %233 = vector.broadcast %232 : vector<1x32xf32> to vector<8x32xf32>
      %234 = arith.addf %231, %233 : vector<8x32xf32>
      %c0_169 = arith.constant 0 : index
      %c0_170 = arith.constant 0 : index
      %c0_171 = arith.constant 0 : index
      %235 = vector.load %arg16[%c0_169, %c0_170, %c0_171] : memref<1x8x32xf32, #tpu.memory_space<vmem>>, vector<1x8x32xf32>
      %236 = vector.shape_cast %235 : vector<1x8x32xf32> to vector<8x32xf32>
      %237 = vector.shape_cast %234 : vector<8x32xf32> to vector<1x8x32xf32>
      tpu.vector_store %arg16[%c0_169, %c0_170, %c0_171], %237 {strides = array<i32>} : memref<1x8x32xf32, #tpu.memory_space<vmem>>, vector<1x8x32xf32>,
    } else {
    }
    return
  }
  func.func @transform_0(%arg0: i32, %arg1: i32, %arg2: i32) -> (i32, i32, i32) {
    %c0_i32 = arith.constant 0 : i32
    %c0_i32_0 = arith.constant 0 : i32
    return %arg0, %arg1, %c0_i32 : i32, i32, i32
  }
  func.func @transform_1(%arg0: i32, %arg1: i32, %arg2: i32) -> (i32, i32, i32) {
    %c0_i32 = arith.constant 0 : i32
    %c0_i32_0 = arith.constant 0 : i32
    return %arg0, %arg1, %c0_i32 : i32, i32, i32
  }
  func.func @transform_2(%arg0: i32, %arg1: i32, %arg2: i32) -> (i32, i32, i32) {
    %c0_i32 = arith.constant 0 : i32
    %c0_i32_0 = arith.constant 0 : i32
    return %arg0, %arg2, %c0_i32 : i32, i32, i32
  }
  func.func @transform_3(%arg0: i32, %arg1: i32, %arg2: i32) -> (i32, i32, i32) {
    %c0_i32 = arith.constant 0 : i32
    %c0_i32_0 = arith.constant 0 : i32
    return %arg0, %arg2, %c0_i32 : i32, i32, i32
  }
  func.func @transform_4(%arg0: i32, %arg1: i32, %arg2: i32) -> (i32, i32) {
    %c0_i32 = arith.constant 0 : i32
    %c0_i32_0 = arith.constant 0 : i32
    %c0_i32_1 = arith.constant 0 : i32
    return %c0_i32, %c0_i32_0 : i32, i32
  }
  func.func @transform_5(%arg0: i32, %arg1: i32, %arg2: i32) -> (i32, i32) {
    %c0_i32 = arith.constant 0 : i32
    %c0_i32_0 = arith.constant 0 : i32
    %c0_i32_1 = arith.constant 0 : i32
    return %c0_i32, %c0_i32_0 : i32, i32
  }
  func.func @transform_6(%arg0: i32, %arg1: i32, %arg2: i32) -> (i32, i32) {
    %c0_i32 = arith.constant 0 : i32
    %c0_i32_0 = arith.constant 0 : i32
    %c0_i32_1 = arith.constant 0 : i32
    return %c0_i32, %c0_i32_0 : i32, i32
  }
  func.func @transform_7(%arg0: i32, %arg1: i32, %arg2: i32) -> (i32, i32, i32) {
    %c0_i32 = arith.constant 0 : i32
    %c0_i32_0 = arith.constant 0 : i32
    %c0_i32_1 = arith.constant 0 : i32
    %c0_i32_2 = arith.constant 0 : i32
    return %c0_i32, %c0_i32_0, %c0_i32_1 : i32, i32, i32
  }
  func.func @transform_8(%arg0: i32, %arg1: i32, %arg2: i32) -> (i32, i32) {
    %c0_i32 = arith.constant 0 : i32
    %c0_i32_0 = arith.constant 0 : i32
    %c0_i32_1 = arith.constant 0 : i32
    return %c0_i32, %c0_i32_0 : i32, i32
  }
  func.func @transform_9(%arg0: i32, %arg1: i32, %arg2: i32) -> (i32, i32) {
    %c0_i32 = arith.constant 0 : i32
    %c0_i32_0 = arith.constant 0 : i32
    %c0_i32_1 = arith.constant 0 : i32
    return %c0_i32, %c0_i32_0 : i32, i32
  }
  func.func @transform_10(%arg0: i32, %arg1: i32, %arg2: i32) -> (i32, i32) {
    %c0_i32 = arith.constant 0 : i32
    %c0_i32_0 = arith.constant 0 : i32
    %c0_i32_1 = arith.constant 0 : i32
    return %c0_i32, %c0_i32_0 : i32, i32
  }
  func.func @transform_11(%arg0: i32, %arg1: i32, %arg2: i32) -> (i32, i32) {
    %c0_i32 = arith.constant 0 : i32
    %c0_i32_0 = arith.constant 0 : i32
    %c0_i32_1 = arith.constant 0 : i32
    return %c0_i32, %c0_i32_0 : i32, i32
  }
  func.func @transform_12(%arg0: i32, %arg1: i32, %arg2: i32) -> (i32, i32) {
    %c0_i32 = arith.constant 0 : i32
    %c0_i32_0 = arith.constant 0 : i32
    %c0_i32_1 = arith.constant 0 : i32
    return %c0_i32, %c0_i32_0 : i32, i32
  }
  func.func @transform_13(%arg0: i32, %arg1: i32, %arg2: i32) -> (i32, i32, i32) {
    %c0_i32 = arith.constant 0 : i32
    %c0_i32_0 = arith.constant 0 : i32
    return %arg0, %arg1, %c0_i32 : i32, i32, i32
  }
}

</mosaic_0001>

<llo_original>
// kernel: tpu_custom_call.1
$region0: #{tpu_custom_call.1}
  #allocation0 [shape = 'u32[]', space=smem, size = 0x4, offset = 0x4, fixed_abs, tag = 'smem constant byte address 0x4 - core index']
  #allocation1 [shape = 'u32[72,128]{1,0:T(1,128)}', space=vmem, size = 0x9000, scoped, tag = 'internal scratch']
  #allocation2 [shape = 'f32[4,8,8]{2,1,0:T(8,128)}', space=vmem, size = 0x4000, scoped, tag = 'scratch operand']
  #allocation3 [shape = 'f32[4,8,1]{2,1,0:T(8,128)}', space=vmem, size = 0x4000, scoped, tag = 'scratch operand']
  #allocation4 [shape = 'f32[4,8,1]{2,1,0:T(8,128)}', space=vmem, size = 0x4000, scoped, tag = 'scratch operand']
  #allocation5 [shape = 'f32[4,8,8]{2,1,0:T(8,128)}', space=vmem, size = 0x4000, scoped, tag = 'scratch operand']
  %s0 = inlined_call_operand.hbm [shape: f32[2,8,32], index: 0, kind: input, shape index: {}]
  %s1 = inlined_call_operand.hbm [shape: f32[2,8,32], index: 1, kind: input, shape index: {}]
  %s2 = inlined_call_operand.hbm [shape: f32[2,16,32], index: 2, kind: input, shape index: {}]
  %s3 = inlined_call_operand.hbm [shape: f32[2,16,32], index: 3, kind: input, shape index: {}]
  %s4 = inlined_call_operand.hbm [shape: f32[32,32], index: 4, kind: input, shape index: {}]
  %s5 = inlined_call_operand.hbm [shape: f32[32,32], index: 5, kind: input, shape index: {}]
  %s6 = inlined_call_operand.hbm [shape: f32[32,32], index: 6, kind: input, shape index: {}]
  %s7 = inlined_call_operand.hbm [shape: f32[4,8,32], index: 7, kind: input, shape index: {}]
  %s8 = inlined_call_operand.vmem [shape: f32[1,32], index: 8, kind: input, shape index: {}]
  %s9 = inlined_call_operand.vmem [shape: f32[1,32], index: 9, kind: input, shape index: {}]
  %s10 = inlined_call_operand.vmem [shape: f32[1,32], index: 10, kind: input, shape index: {}]
  %s11 = inlined_call_operand.vmem [shape: f32[1,32], index: 11, kind: input, shape index: {}]
  %s12 = inlined_call_operand.vmem [shape: f32[1,32], index: 12, kind: input, shape index: {}]
  %s13 = inlined_call_operand.hbm [shape: f32[2,8,32], index: 13, kind: output, shape index: {}]
  %s14 = sld [smem:[#allocation0]]
  $region125: #{tpu_custom_call.1} parent=0
    _
  %s16 = ssub.s32 1, %s14
  %s17 = scalar_select 0, %s16, %s14
  $region1: #{tpu_custom_call.1} parent=0
    #allocation6 [shape = 'u8[8192]{0}', space=vmem, size = 0x2000, scoped, tag = 'input window, operand 0']
    #allocation7 [shape = 's32[2]{0}', space=sflag, size = 0x8, scoped, tag = 'scoped memory for tpu_custom_call.1']
    #allocation8 [shape = 's32[2]{0}', space=sflag, size = 0x8, scoped, tag = 'scoped memory for tpu_custom_call.1']
    #allocation9 [shape = 'u8[8192]{0}', space=vmem, size = 0x2000, scoped, tag = 'input window, operand 1']
    #allocation10 [shape = 's32[2]{0}', space=sflag, size = 0x8, scoped, tag = 'scoped memory for tpu_custom_call.1']
    #allocation11 [shape = 'u8[16384]{0}', space=vmem, size = 0x4000, scoped, tag = 'input window, operand 2']
    #allocation12 [shape = 'u8[16384]{0}', space=vmem, size = 0x4000, scoped, tag = 'input window, operand 3']
    #allocation13 [shape = 's32[2]{0}', space=sflag, size = 0x8, scoped, tag = 'scoped memory for tpu_custom_call.1']
    #allocation14 [shape = 'u8[16384]{0}', space=vmem, size = 0x4000, scoped, tag = 'input window, operand 4, single buffered']
    #allocation15 [shape = 'u8[16384]{0}', space=vmem, size = 0x4000, scoped, tag = 'input window, operand 5, single buffered']
    #allocation16 [shape = 's32[1]{0}', space=sflag, size = 0x4, scoped, tag = 'scoped memory for tpu_custom_call.1']
    #allocation17 [shape = 'u8[16384]{0}', space=vmem, size = 0x4000, scoped, tag = 'input window, operand 6, single buffered']
    #allocation18 [shape = 'u8[16384]{0}', space=vmem, size = 0x4000, scoped, tag = 'input window, operand 7, single buffered']
    #allocation19 [shape = 's32[1]{0}', space=sflag, size = 0x4, scoped, tag = 'scoped memory for tpu_custom_call.1']
    #allocation20 [shape = 'u8[8192]{0}', space=vmem, size = 0x2000, scoped, tag = 'output window, operand 0']
    %18 = vsyncpa [#allocation7], 0
    %s19 = scalar_lea.sflag [#allocation7], 1
    %20 = vsyncpa %s19, 0
    %21 = vsyncpa [#allocation10], 0
    %s22 = scalar_lea.sflag [#allocation10], 1
    %23 = vsyncpa %s22, 0
    %24 = vsyncpa [#allocation13], 0
    %s25 = scalar_lea.sflag [#allocation13], 1
    %26 = vsyncpa %s25, 0
    %27 = vsyncpa [#allocation16], 0
    %28 = vsyncpa [#allocation19], 0
    %29 = vsyncpa [#allocation8], 0
    %s30 = scalar_lea.sflag [#allocation8], 1
    %31 = vsyncpa %s30, 0
    loop: start=0, step=1, limit=4
    $region2: #{tpu_custom_call.1} parent=1 // loop_pre_header
      _
    $region3: #{tpu_custom_call.1} parent=1 // loop_header
      %s33 = sphi 0, %s37
      %p34 = scmp.ge.s32.totalorder %s33, 4
      %s40 = sphi 0, %s59
      %s41 = sphi 0, %s55
      %s42 = sphi 0, %s51
      %s43 = sphi 0, %s40
      %s44 = sphi 0, %s41
      %s45 = sphi 0, %s42
      %s46 = sphi 0, %s43
      %s47 = sphi 0, %s44
      %s48 = sphi 0, %s45
      %s64 = sphi 0, %s66
      %s67 = sphi 0, %s64
      %s68 = sphi 0, %s67
      %s84 = sphi 0, %s68
      %s92 = sphi 0, %s94
      %s95 = sphi 0, %s92
      %s96 = sphi 0, %s95
      %s112 = sphi 0, %s96
      %s120 = sphi 0, %s122
      %s123 = sphi 0, %s120
      %s124 = sphi 0, %s123
      %s140 = sphi 0, %s124
      %s148 = sphi 0, %s150
      %s151 = sphi 0, %s148
      %s152 = sphi 0, %s151
      %s168 = sphi 0, %s152
      %s172 = sphi 0, %s172
      %s174 = sphi 0, %s172
      %s175 = sphi 0, %s174
      %s189 = sphi 0, %s175
      %s193 = sphi 0, %s193
      %s195 = sphi 0, %s193
      %s196 = sphi 0, %s195
      %s210 = sphi 0, %s196
      %s214 = sphi 0, %s214
      %s216 = sphi 0, %s214
      %s217 = sphi 0, %s216
      %s231 = sphi 0, %s217
      %s235 = sphi 0, %s235
      %s237 = sphi 0, %s235
      %s238 = sphi 0, %s237
      %s252 = sphi 0, %s238
      %s256 = sphi 0, %s256
      %s258 = sphi 0, %s256
      %s259 = sphi 0, %s258
      %s273 = sphi 0, %s259
      %s277 = sphi 0, %s277
      %s279 = sphi 0, %s277
      %s280 = sphi 0, %s279
      %s294 = sphi 0, %s280
      %s298 = sphi 0, %s298
      %s300 = sphi 0, %s298
      %s301 = sphi 0, %s300
      %s315 = sphi 0, %s301
      %s319 = sphi 0, %s319
      %s321 = sphi 0, %s319
      %s322 = sphi 0, %s321
      %s336 = sphi 0, %s322
      %s340 = sphi 0, %s340
      %s342 = sphi 0, %s340
      %s343 = sphi 0, %s342
      %s357 = sphi 0, %s343
      %s365 = sphi 0, %s367
      %s368 = sphi 0, %s365
      %s369 = sphi 0, %s368
      %s385 = sphi 0, %s369
    $region4: #{tpu_custom_call.1} parent=1 // loop_header_branch
      %36 = sbr.rel (%p34) target = $region8
    $region5: #{tpu_custom_call.1} parent=1 // loop_body
      %s38 = ssub.s32 %s33, 1
      %s39 = ssub.s32 %s33, 2
      %s49 = sadd.s32 1, %s42
      %p50 = scmp.ge.s32.totalorder %s49, 1
      %s51 = scalar_select %p50, 0, %s49
      %s52 = sadd.s32 1, %s41
      %s53 = scalar_select %p50, %s52, %s41
      %p54 = scmp.ge.s32.totalorder %s53, 1
      %s55 = scalar_select %p54, 0, %s53
      %s56 = sadd.s32 1, %s40
      %s57 = scalar_select %p54, %s56, %s40
      %p58 = scmp.ge.s32.totalorder %s57, 2
      %s59 = scalar_select %p58, 0, %s57
      %s60 = ssub.s32 %s40, %s59
      %s61 = ssub.s32 %s41, %s55
      %s62 = sor.u32 %s60, %s61
      %p63 = scmp.eq.s32.totalorder %s62, 0
      %s65 = sadd.s32 %s64, 1
      %s66 = scalar_select %p63, %s64, %s65
      %p69 = pneg %p63
      %p70 = scmp.eq.s32.totalorder %s33, 1
      %p71 = por %p69, %p70
      %p72 = scmp.ne.s32.totalorder %s64, %s67
      %p73 = scmp.eq.s32.totalorder %s33, 0
      %p74 = por %p72, %p73
      %p75 = scmp.ne.s32.totalorder %s64, %s67
      %p76 = scmp.eq.s32.totalorder %s38, 1
      %p77 = por %p75, %p76
      %p78 = scmp.ne.s32.totalorder %s67, %s68
      %p79 = scmp.eq.s32.totalorder %s38, 0
      %p80 = por %p78, %p79
      %p81 = scmp.ne.s32.totalorder %s67, %s68
      %p82 = scmp.eq.s32.totalorder %s39, 1
      %p83 = por %p81, %p82
      %p85 = scmp.ne.s32.totalorder %s68, %s84
      %p86 = scmp.eq.s32.totalorder %s39, 0
      %p87 = por %p85, %p86
      %s88 = ssub.s32 %s40, %s59
      %s89 = ssub.s32 %s41, %s55
      %s90 = sor.u32 %s88, %s89
      %p91 = scmp.eq.s32.totalorder %s90, 0
      %s93 = sadd.s32 %s92, 1
      %s94 = scalar_select %p91, %s92, %s93
      %p97 = pneg %p91
      %p98 = scmp.eq.s32.totalorder %s33, 1
      %p99 = por %p97, %p98
      %p100 = scmp.ne.s32.totalorder %s92, %s95
      %p101 = scmp.eq.s32.totalorder %s33, 0
      %p102 = por %p100, %p101
      %p103 = scmp.ne.s32.totalorder %s92, %s95
      %p104 = scmp.eq.s32.totalorder %s38, 1
      %p105 = por %p103, %p104
      %p106 = scmp.ne.s32.totalorder %s95, %s96
      %p107 = scmp.eq.s32.totalorder %s38, 0
      %p108 = por %p106, %p107
      %p109 = scmp.ne.s32.totalorder %s95, %s96
      %p110 = scmp.eq.s32.totalorder %s39, 1
      %p111 = por %p109, %p110
      %p113 = scmp.ne.s32.totalorder %s96, %s112
      %p114 = scmp.eq.s32.totalorder %s39, 0
      %p115 = por %p113, %p114
      %s116 = ssub.s32 %s40, %s59
      %s117 = ssub.s32 %s42, %s51
      %s118 = sor.u32 %s116, %s117
      %p119 = scmp.eq.s32.totalorder %s118, 0
      %s121 = sadd.s32 %s120, 1
      %s122 = scalar_select %p119, %s120, %s121
      %p125 = pneg %p119
      %p126 = scmp.eq.s32.totalorder %s33, 1
      %p127 = por %p125, %p126
      %p128 = scmp.ne.s32.totalorder %s120, %s123
      %p129 = scmp.eq.s32.totalorder %s33, 0
      %p130 = por %p128, %p129
      %p131 = scmp.ne.s32.totalorder %s120, %s123
      %p132 = scmp.eq.s32.totalorder %s38, 1
      %p133 = por %p131, %p132
      %p134 = scmp.ne.s32.totalorder %s123, %s124
      %p135 = scmp.eq.s32.totalorder %s38, 0
      %p136 = por %p134, %p135
      %p137 = scmp.ne.s32.totalorder %s123, %s124
      %p138 = scmp.eq.s32.totalorder %s39, 1
      %p139 = por %p137, %p138
      %p141 = scmp.ne.s32.totalorder %s124, %s140
      %p142 = scmp.eq.s32.totalorder %s39, 0
      %p143 = por %p141, %p142
      %s144 = ssub.s32 %s40, %s59
      %s145 = ssub.s32 %s42, %s51
      %s146 = sor.u32 %s144, %s145
      %p147 = scmp.eq.s32.totalorder %s146, 0
      %s149 = sadd.s32 %s148, 1
      %s150 = scalar_select %p147, %s148, %s149
      %p153 = pneg %p147
      %p154 = scmp.eq.s32.totalorder %s33, 1
      %p155 = por %p153, %p154
      %p156 = scmp.ne.s32.totalorder %s148, %s151
      %p157 = scmp.eq.s32.totalorder %s33, 0
      %p158 = por %p156, %p157
      %p159 = scmp.ne.s32.totalorder %s148, %s151
      %p160 = scmp.eq.s32.totalorder %s38, 1
      %p161 = por %p159, %p160
      %p162 = scmp.ne.s32.totalorder %s151, %s152
      %p163 = scmp.eq.s32.totalorder %s38, 0
      %p164 = por %p162, %p163
      %p165 = scmp.ne.s32.totalorder %s151, %s152
      %p166 = scmp.eq.s32.totalorder %s39, 1
      %p167 = por %p165, %p166
      %p169 = scmp.ne.s32.totalorder %s152, %s168
      %p170 = scmp.eq.s32.totalorder %s39, 0
      %p171 = por %p169, %p170
      %s173 = sadd.s32 %s172, 1
      %p176 = scmp.eq.s32.totalorder %s33, 1
      %p177 = scmp.ne.s32.totalorder %s172, %s174
      %p178 = scmp.eq.s32.totalorder %s33, 0
      %p179 = por %p177, %p178
      %p180 = scmp.ne.s32.totalorder %s172, %s174
      %p181 = scmp.eq.s32.totalorder %s38, 1
      %p182 = por %p180, %p181
      %p183 = scmp.ne.s32.totalorder %s174, %s175
      %p184 = scmp.eq.s32.totalorder %s38, 0
      %p185 = por %p183, %p184
      %p186 = scmp.ne.s32.totalorder %s174, %s175
      %p187 = scmp.eq.s32.totalorder %s39, 1
      %p188 = por %p186, %p187
      %p190 = scmp.ne.s32.totalorder %s175, %s189
      %p191 = scmp.eq.s32.totalorder %s39, 0
      %p192 = por %p190, %p191
      %s194 = sadd.s32 %s193, 1
      %p197 = scmp.eq.s32.totalorder %s33, 1
      %p198 = scmp.ne.s32.totalorder %s193, %s195
      %p199 = scmp.eq.s32.totalorder %s33, 0
      %p200 = por %p198, %p199
      %p201 = scmp.ne.s32.totalorder %s193, %s195
      %p202 = scmp.eq.s32.totalorder %s38, 1
      %p203 = por %p201, %p202
      %p204 = scmp.ne.s32.totalorder %s195, %s196
      %p205 = scmp.eq.s32.totalorder %s38, 0
      %p206 = por %p204, %p205
      %p207 = scmp.ne.s32.totalorder %s195, %s196
      %p208 = scmp.eq.s32.totalorder %s39, 1
      %p209 = por %p207, %p208
      %p211 = scmp.ne.s32.totalorder %s196, %s210
      %p212 = scmp.eq.s32.totalorder %s39, 0
      %p213 = por %p211, %p212
      %s215 = sadd.s32 %s214, 1
      %p218 = scmp.eq.s32.totalorder %s33, 1
      %p219 = scmp.ne.s32.totalorder %s214, %s216
      %p220 = scmp.eq.s32.totalorder %s33, 0
      %p221 = por %p219, %p220
      %p222 = scmp.ne.s32.totalorder %s214, %s216
      %p223 = scmp.eq.s32.totalorder %s38, 1
      %p224 = por %p222, %p223
      %p225 = scmp.ne.s32.totalorder %s216, %s217
      %p226 = scmp.eq.s32.totalorder %s38, 0
      %p227 = por %p225, %p226
      %p228 = scmp.ne.s32.totalorder %s216, %s217
      %p229 = scmp.eq.s32.totalorder %s39, 1
      %p230 = por %p228, %p229
      %p232 = scmp.ne.s32.totalorder %s217, %s231
      %p233 = scmp.eq.s32.totalorder %s39, 0
      %p234 = por %p232, %p233
      %s236 = sadd.s32 %s235, 1
      %p239 = scmp.eq.s32.totalorder %s33, 1
      %p240 = scmp.ne.s32.totalorder %s235, %s237
      %p241 = scmp.eq.s32.totalorder %s33, 0
      %p242 = por %p240, %p241
      %p243 = scmp.ne.s32.totalorder %s235, %s237
      %p244 = scmp.eq.s32.totalorder %s38, 1
      %p245 = por %p243, %p244
      %p246 = scmp.ne.s32.totalorder %s237, %s238
      %p247 = scmp.eq.s32.totalorder %s38, 0
      %p248 = por %p246, %p247
      %p249 = scmp.ne.s32.totalorder %s237, %s238
      %p250 = scmp.eq.s32.totalorder %s39, 1
      %p251 = por %p249, %p250
      %p253 = scmp.ne.s32.totalorder %s238, %s252
      %p254 = scmp.eq.s32.totalorder %s39, 0
      %p255 = por %p253, %p254
      %s257 = sadd.s32 %s256, 1
      %p260 = scmp.eq.s32.totalorder %s33, 1
      %p261 = scmp.ne.s32.totalorder %s256, %s258
      %p262 = scmp.eq.s32.totalorder %s33, 0
      %p263 = por %p261, %p262
      %p264 = scmp.ne.s32.totalorder %s256, %s258
      %p265 = scmp.eq.s32.totalorder %s38, 1
      %p266 = por %p264, %p265
      %p267 = scmp.ne.s32.totalorder %s258, %s259
      %p268 = scmp.eq.s32.totalorder %s38, 0
      %p269 = por %p267, %p268
      %p270 = scmp.ne.s32.totalorder %s258, %s259
      %p271 = scmp.eq.s32.totalorder %s39, 1
      %p272 = por %p270, %p271
      %p274 = scmp.ne.s32.totalorder %s259, %s273
      %p275 = scmp.eq.s32.totalorder %s39, 0
      %p276 = por %p274, %p275
      %s278 = sadd.s32 %s277, 1
      %p281 = scmp.eq.s32.totalorder %s33, 1
      %p282 = scmp.ne.s32.totalorder %s277, %s279
      %p283 = scmp.eq.s32.totalorder %s33, 0
      %p284 = por %p282, %p283
      %p285 = scmp.ne.s32.totalorder %s277, %s279
      %p286 = scmp.eq.s32.totalorder %s38, 1
      %p287 = por %p285, %p286
      %p288 = scmp.ne.s32.totalorder %s279, %s280
      %p289 = scmp.eq.s32.totalorder %s38, 0
      %p290 = por %p288, %p289
      %p291 = scmp.ne.s32.totalorder %s279, %s280
      %p292 = scmp.eq.s32.totalorder %s39, 1
      %p293 = por %p291, %p292
      %p295 = scmp.ne.s32.totalorder %s280, %s294
      %p296 = scmp.eq.s32.totalorder %s39, 0
      %p297 = por %p295, %p296
      %s299 = sadd.s32 %s298, 1
      %p302 = scmp.eq.s32.totalorder %s33, 1
      %p303 = scmp.ne.s32.totalorder %s298, %s300
      %p304 = scmp.eq.s32.totalorder %s33, 0
      %p305 = por %p303, %p304
      %p306 = scmp.ne.s32.totalorder %s298, %s300
      %p307 = scmp.eq.s32.totalorder %s38, 1
      %p308 = por %p306, %p307
      %p309 = scmp.ne.s32.totalorder %s300, %s301
      %p310 = scmp.eq.s32.totalorder %s38, 0
      %p311 = por %p309, %p310
      %p312 = scmp.ne.s32.totalorder %s300, %s301
      %p313 = scmp.eq.s32.totalorder %s39, 1
      %p314 = por %p312, %p313
      %p316 = scmp.ne.s32.totalorder %s301, %s315
      %p317 = scmp.eq.s32.totalorder %s39, 0
      %p318 = por %p316, %p317
      %s320 = sadd.s32 %s319, 1
      %p323 = scmp.eq.s32.totalorder %s33, 1
      %p324 = scmp.ne.s32.totalorder %s319, %s321
      %p325 = scmp.eq.s32.totalorder %s33, 0
      %p326 = por %p324, %p325
      %p327 = scmp.ne.s32.totalorder %s319, %s321
      %p328 = scmp.eq.s32.totalorder %s38, 1
      %p329 = por %p327, %p328
      %p330 = scmp.ne.s32.totalorder %s321, %s322
      %p331 = scmp.eq.s32.totalorder %s38, 0
      %p332 = por %p330, %p331
      %p333 = scmp.ne.s32.totalorder %s321, %s322
      %p334 = scmp.eq.s32.totalorder %s39, 1
      %p335 = por %p333, %p334
      %p337 = scmp.ne.s32.totalorder %s322, %s336
      %p338 = scmp.eq.s32.totalorder %s39, 0
      %p339 = por %p337, %p338
      %s341 = sadd.s32 %s340, 1
      %p344 = scmp.eq.s32.totalorder %s33, 1
      %p345 = scmp.ne.s32.totalorder %s340, %s342
      %p346 = scmp.eq.s32.totalorder %s33, 0
      %p347 = por %p345, %p346
      %p348 = scmp.ne.s32.totalorder %s340, %s342
      %p349 = scmp.eq.s32.totalorder %s38, 1
      %p350 = por %p348, %p349
      %p351 = scmp.ne.s32.totalorder %s342, %s343
      %p352 = scmp.eq.s32.totalorder %s38, 0
      %p353 = por %p351, %p352
      %p354 = scmp.ne.s32.totalorder %s342, %s343
      %p355 = scmp.eq.s32.totalorder %s39, 1
      %p356 = por %p354, %p355
      %p358 = scmp.ne.s32.totalorder %s343, %s357
      %p359 = scmp.eq.s32.totalorder %s39, 0
      %p360 = por %p358, %p359
      %s361 = ssub.s32 %s40, %s59
      %s362 = ssub.s32 %s41, %s55
      %s363 = sor.u32 %s361, %s362
      %p364 = scmp.eq.s32.totalorder %s363, 0
      %s366 = sadd.s32 %s365, 1
      %s367 = scalar_select %p364, %s365, %s366
      %p370 = pneg %p364
      %p371 = scmp.eq.s32.totalorder %s33, 1
      %p372 = por %p370, %p371
      %p373 = scmp.ne.s32.totalorder %s365, %s368
      %p374 = scmp.eq.s32.totalorder %s33, 0
      %p375 = por %p373, %p374
      %p376 = scmp.ne.s32.totalorder %s365, %s368
      %p377 = scmp.eq.s32.totalorder %s38, 1
      %p378 = por %p376, %p377
      %p379 = scmp.ne.s32.totalorder %s368, %s369
      %p380 = scmp.eq.s32.totalorder %s38, 0
      %p381 = por %p379, %p380
      %p382 = scmp.ne.s32.totalorder %s368, %s369
      %p383 = scmp.eq.s32.totalorder %s39, 1
      %p384 = por %p382, %p383
      %p386 = scmp.ne.s32.totalorder %s369, %s385
      %p387 = scmp.eq.s32.totalorder %s39, 0
      %p388 = por %p386, %p387
      %p389 = scmp.le.s32.totalorder 1, %s33
      %p390 = scmp.lt.s32.totalorder %s33, 3
      %p391 = pnand %p389, %p390
      %p392 = pneg %p391
      // Predicated region
      $region9: #{tpu_custom_call.1} parent=5 // pred_check
        _
      $region10: #{tpu_custom_call.1} parent=5 // pred_check_branch
        %394 = sbr.rel (%p391) target = $region12
      $region11: #{tpu_custom_call.1} parent=5 // pred_region
        %s395 = ssub.s32 %s33, 1
        // Predicated region
        $region13: #{tpu_custom_call.1} parent=11 // pred_check
          %p396 = pneg %p185
        $region14: #{tpu_custom_call.1} parent=11 // pred_check_branch
          %398 = sbr.rel (%p396) target = $region16
        $region15: #{tpu_custom_call.1} parent=11 // pred_region
          %400 = vsyncadd [#allocation13], 0
          %s401 = sshll.u32 %s4, 4
          %s402 = int_to_ptr.hbm [resolvable:$true] %s401
          %s403 = sshll.u32 [#allocation14], 4
          %s404 = int_to_ptr.vmem [resolvable:$true] %s403
          %409 = dma.hbm_to_vmem [thread:$0]  %s402, 512, %s404, [#allocation13], 128, 128, 8
        $region16: #{tpu_custom_call.1} parent=11 // pred_fallthru
          _
        // Predicated region
        $region17: #{tpu_custom_call.1} parent=11 // pred_check
          %p410 = pneg %p206
        $region18: #{tpu_custom_call.1} parent=11 // pred_check_branch
          %412 = sbr.rel (%p410) target = $region20
        $region19: #{tpu_custom_call.1} parent=11 // pred_region
          %414 = vsyncadd [#allocation16], 0
          %s415 = sshll.u32 %s5, 4
          %s416 = int_to_ptr.hbm [resolvable:$true] %s415
          %s417 = sshll.u32 [#allocation15], 4
          %s418 = int_to_ptr.vmem [resolvable:$true] %s417
          %423 = dma.hbm_to_vmem [thread:$0]  %s416, 512, %s418, [#allocation16], 128, 128, 8
        $region20: #{tpu_custom_call.1} parent=11 // pred_fallthru
          _
        // Predicated region
        $region21: #{tpu_custom_call.1} parent=11 // pred_check
          %p424 = pneg %p227
        $region22: #{tpu_custom_call.1} parent=11 // pred_check_branch
          %426 = sbr.rel (%p424) target = $region24
        $region23: #{tpu_custom_call.1} parent=11 // pred_region
          %428 = vsyncadd [#allocation16], 0
          %s429 = sshll.u32 %s6, 4
          %s430 = int_to_ptr.hbm [resolvable:$true] %s429
          %s431 = sshll.u32 [#allocation17], 4
          %s432 = int_to_ptr.vmem [resolvable:$true] %s431
          %437 = dma.hbm_to_vmem [thread:$0]  %s430, 512, %s432, [#allocation16], 128, 128, 8
        $region24: #{tpu_custom_call.1} parent=11 // pred_fallthru
          _
        // Predicated region
        $region25: #{tpu_custom_call.1} parent=11 // pred_check
          %p438 = pneg %p248
        $region26: #{tpu_custom_call.1} parent=11 // pred_check_branch
          %440 = sbr.rel (%p438) target = $region28
        $region27: #{tpu_custom_call.1} parent=11 // pred_region
          %442 = vsyncadd [#allocation19], 0
          %s443 = sshll.u32 %s7, 4
          %s444 = int_to_ptr.hbm [resolvable:$true] %s443
          %s445 = sshll.u32 [#allocation18], 4
          %s446 = int_to_ptr.vmem [resolvable:$true] %s445
          %451 = dma.hbm_to_vmem [thread:$0]  %s444, 512, %s446, [#allocation19], 128, 128, 8
        $region28: #{tpu_custom_call.1} parent=11 // pred_fallthru
          _
        // Predicated region
        $region29: #{tpu_custom_call.1} parent=11 // pred_check
          %p452 = pneg %p269
        $region30: #{tpu_custom_call.1} parent=11 // pred_check_branch
          %454 = sbr.rel (%p452) target = $region32
        $region31: #{tpu_custom_call.1} parent=11 // pred_region
          _
        $region32: #{tpu_custom_call.1} parent=11 // pred_fallthru
          _
        // Predicated region
        $region33: #{tpu_custom_call.1} parent=11 // pred_check
          %p455 = pneg %p290
        $region34: #{tpu_custom_call.1} parent=11 // pred_check_branch
          %457 = sbr.rel (%p455) target = $region36
        $region35: #{tpu_custom_call.1} parent=11 // pred_region
          _
        $region36: #{tpu_custom_call.1} parent=11 // pred_fallthru
          _
        // Predicated region
        $region37: #{tpu_custom_call.1} parent=11 // pred_check
          %p458 = pneg %p311
        $region38: #{tpu_custom_call.1} parent=11 // pred_check_branch
          %460 = sbr.rel (%p458) target = $region40
        $region39: #{tpu_custom_call.1} parent=11 // pred_region
          _
        $region40: #{tpu_custom_call.1} parent=11 // pred_fallthru
          _
        // Predicated region
        $region41: #{tpu_custom_call.1} parent=11 // pred_check
          %p461 = pneg %p332
        $region42: #{tpu_custom_call.1} parent=11 // pred_check_branch
          %463 = sbr.rel (%p461) target = $region44
        $region43: #{tpu_custom_call.1} parent=11 // pred_region
          _
        $region44: #{tpu_custom_call.1} parent=11 // pred_fallthru
          _
        // Predicated region
        $region45: #{tpu_custom_call.1} parent=11 // pred_check
          %p464 = pneg %p353
        $region46: #{tpu_custom_call.1} parent=11 // pred_check_branch
          %466 = sbr.rel (%p464) target = $region48
        $region47: #{tpu_custom_call.1} parent=11 // pred_region
          _
        $region48: #{tpu_custom_call.1} parent=11 // pred_fallthru
          _
      $region12: #{tpu_custom_call.1} parent=5 // pred_fallthru
        _
      %p467 = scmp.lt.s32.totalorder %s33, 2
      // Predicated region
      $region49: #{tpu_custom_call.1} parent=5 // pred_check
        %p468 = pneg %p467
      $region50: #{tpu_custom_call.1} parent=5 // pred_check_branch
        %470 = sbr.rel (%p468) target = $region52
      $region51: #{tpu_custom_call.1} parent=5 // pred_region
        // Predicated region
        $region53: #{tpu_custom_call.1} parent=51 // pred_check
          %p471 = pneg %p74
        $region54: #{tpu_custom_call.1} parent=51 // pred_check_branch
          %473 = sbr.rel (%p471) target = $region56
        $region55: #{tpu_custom_call.1} parent=51 // pred_region
          %s474 = sand.u32 %s64, 1
          %s475 = scalar_lea.sflag [#allocation7], %s474
          %s476 = sand.u32 %s64, 1
          %s477 = smul.addr %s476, 8
          %s478 = scalar_lea.vmem [#allocation6], %s477
          %480 = vsyncadd %s475, 0
          %s481 = sadd.s32 %s41, %s40
          %s482 = smul.addr %s481, 8
          %s483 = scalar_lea.hbm %s0, %s482
          %s485 = sshll.u32 %s483, 4
          %s486 = int_to_ptr.hbm [resolvable:$true] %s485
          %s487 = sshll.u32 %s478, 4
          %s488 = int_to_ptr.vmem [resolvable:$true] %s487
          %490 = dma.hbm_to_vmem [thread:$0]  %s486, 128, %s488, %s475
        $region56: #{tpu_custom_call.1} parent=51 // pred_fallthru
          _
        // Predicated region
        $region57: #{tpu_custom_call.1} parent=51 // pred_check
          %p491 = pneg %p102
        $region58: #{tpu_custom_call.1} parent=51 // pred_check_branch
          %493 = sbr.rel (%p491) target = $region60
        $region59: #{tpu_custom_call.1} parent=51 // pred_region
          %s494 = sand.u32 %s33, 1
          %s495 = scalar_lea.sflag [#allocation10], %s494
          %s496 = sand.u32 %s92, 1
          %s497 = smul.addr %s496, 8
          %s498 = scalar_lea.vmem [#allocation9], %s497
          %500 = vsyncadd %s495, 0
          %s501 = sadd.s32 %s41, %s40
          %s502 = smul.addr %s501, 8
          %s503 = scalar_lea.hbm %s1, %s502
          %s505 = sshll.u32 %s503, 4
          %s506 = int_to_ptr.hbm [resolvable:$true] %s505
          %s507 = sshll.u32 %s498, 4
          %s508 = int_to_ptr.vmem [resolvable:$true] %s507
          %510 = dma.hbm_to_vmem [thread:$0]  %s506, 128, %s508, %s495
        $region60: #{tpu_custom_call.1} parent=51 // pred_fallthru
          _
        // Predicated region
        $region61: #{tpu_custom_call.1} parent=51 // pred_check
          %p511 = pneg %p130
        $region62: #{tpu_custom_call.1} parent=51 // pred_check_branch
          %513 = sbr.rel (%p511) target = $region64
        $region63: #{tpu_custom_call.1} parent=51 // pred_region
          %s514 = sand.u32 %s33, 1
          %s515 = scalar_lea.sflag [#allocation10], %s514
          %s516 = sand.u32 %s120, 1
          %s517 = smul.addr %s516, 16
          %s518 = scalar_lea.vmem [#allocation11], %s517
          %s519 = smul.u32 2, %s42
          %521 = vsyncadd %s515, 0
          %s522 = smul.addr %s40, 2
          %s523 = sadd.s32 %s519, %s522
          %s524 = smul.addr %s523, 8
          %s525 = scalar_lea.hbm %s2, %s524
          %s526 = sshll.u32 %s525, 4
          %s527 = int_to_ptr.hbm [resolvable:$true] %s526
          %s528 = sshll.u32 %s518, 4
          %s529 = int_to_ptr.vmem [resolvable:$true] %s528
          %534 = dma.hbm_to_vmem [thread:$0]  %s527, 256, %s529, %s515, 128, 128, 8
        $region64: #{tpu_custom_call.1} parent=51 // pred_fallthru
          _
        // Predicated region
        $region65: #{tpu_custom_call.1} parent=51 // pred_check
          %p535 = pneg %p158
        $region66: #{tpu_custom_call.1} parent=51 // pred_check_branch
          %537 = sbr.rel (%p535) target = $region68
        $region67: #{tpu_custom_call.1} parent=51 // pred_region
          %s538 = sand.u32 %s33, 1
          %s539 = scalar_lea.sflag [#allocation13], %s538
          %s540 = sand.u32 %s148, 1
          %s541 = smul.addr %s540, 16
          %s542 = scalar_lea.vmem [#allocation12], %s541
          %s543 = smul.u32 2, %s42
          %545 = vsyncadd %s539, 0
          %s546 = smul.addr %s40, 2
          %s547 = sadd.s32 %s543, %s546
          %s548 = smul.addr %s547, 8
          %s549 = scalar_lea.hbm %s3, %s548
          %s550 = sshll.u32 %s549, 4
          %s551 = int_to_ptr.hbm [resolvable:$true] %s550
          %s552 = sshll.u32 %s542, 4
          %s553 = int_to_ptr.vmem [resolvable:$true] %s552
          %558 = dma.hbm_to_vmem [thread:$0]  %s551, 256, %s553, %s539, 128, 128, 8
        $region68: #{tpu_custom_call.1} parent=51 // pred_fallthru
          _
      $region52: #{tpu_custom_call.1} parent=5 // pred_fallthru
        _
      %p559 = scmp.le.s32.totalorder 1, %s33
      %p560 = scmp.lt.s32.totalorder %s33, 3
      %p561 = pnand %p559, %p560
      %p562 = pneg %p561
      // Predicated region
      $region69: #{tpu_custom_call.1} parent=5 // pred_check
        _
      $region70: #{tpu_custom_call.1} parent=5 // pred_check_branch
        %564 = sbr.rel (%p561) target = $region72
      $region71: #{tpu_custom_call.1} parent=5 // pred_region
        %s565 = ssub.s32 %s33, 1
        %s566 = sand.u32 %s67, 1
        %s567 = scalar_lea.sflag [#allocation7], %s566
        %s568 = sand.u32 %s67, 1
        %s569 = smul.addr %s568, 8
        %s570 = scalar_lea.vmem [#allocation6], %s569
        // Predicated region
        $region73: #{tpu_custom_call.1} parent=71 // pred_check
          %p571 = pneg %p80
        $region74: #{tpu_custom_call.1} parent=71 // pred_check_branch
          %573 = sbr.rel (%p571) target = $region76
        $region75: #{tpu_custom_call.1} parent=71 // pred_region
          %575 = dma.done %s567, 128
        $region76: #{tpu_custom_call.1} parent=71 // pred_fallthru
          _
        %s576 = sand.u32 %s38, 1
        %s577 = scalar_lea.sflag [#allocation10], %s576
        %s578 = sand.u32 %s95, 1
        %s579 = smul.addr %s578, 8
        %s580 = scalar_lea.vmem [#allocation9], %s579
        // Predicated region
        $region77: #{tpu_custom_call.1} parent=71 // pred_check
          %p581 = pneg %p108
        $region78: #{tpu_custom_call.1} parent=71 // pred_check_branch
          %583 = sbr.rel (%p581) target = $region80
        $region79: #{tpu_custom_call.1} parent=71 // pred_region
          %585 = dma.done %s577, 128
        $region80: #{tpu_custom_call.1} parent=71 // pred_fallthru
          _
        %s586 = sand.u32 %s38, 1
        %s587 = scalar_lea.sflag [#allocation10], %s586
        %s588 = sand.u32 %s123, 1
        %s589 = smul.addr %s588, 16
        %s590 = scalar_lea.vmem [#allocation11], %s589
        // Predicated region
        $region81: #{tpu_custom_call.1} parent=71 // pred_check
          %p591 = pneg %p136
        $region82: #{tpu_custom_call.1} parent=71 // pred_check_branch
          %593 = sbr.rel (%p591) target = $region84
        $region83: #{tpu_custom_call.1} parent=71 // pred_region
          %595 = dma.done %s587, 256
        $region84: #{tpu_custom_call.1} parent=71 // pred_fallthru
          _
        %s596 = sand.u32 %s38, 1
        %s597 = scalar_lea.sflag [#allocation13], %s596
        %s598 = sand.u32 %s151, 1
        %s599 = smul.addr %s598, 16
        %s600 = scalar_lea.vmem [#allocation12], %s599
        // Predicated region
        $region85: #{tpu_custom_call.1} parent=71 // pred_check
          %p601 = pneg %p164
        $region86: #{tpu_custom_call.1} parent=71 // pred_check_branch
          %603 = sbr.rel (%p601) target = $region88
        $region87: #{tpu_custom_call.1} parent=71 // pred_region
          %605 = dma.done %s597, 256
        $region88: #{tpu_custom_call.1} parent=71 // pred_fallthru
          _
        // Predicated region
        $region89: #{tpu_custom_call.1} parent=71 // pred_check
          %p606 = pneg %p185
        $region90: #{tpu_custom_call.1} parent=71 // pred_check_branch
          %608 = sbr.rel (%p606) target = $region92
        $region91: #{tpu_custom_call.1} parent=71 // pred_region
          %610 = dma.done [#allocation13], 512
        $region92: #{tpu_custom_call.1} parent=71 // pred_fallthru
          _
        // Predicated region
        $region93: #{tpu_custom_call.1} parent=71 // pred_check
          %p611 = pneg %p206
        $region94: #{tpu_custom_call.1} parent=71 // pred_check_branch
          %613 = sbr.rel (%p611) target = $region96
        $region95: #{tpu_custom_call.1} parent=71 // pred_region
          %615 = dma.done [#allocation16], 512
        $region96: #{tpu_custom_call.1} parent=71 // pred_fallthru
          _
        // Predicated region
        $region97: #{tpu_custom_call.1} parent=71 // pred_check
          %p616 = pneg %p227
        $region98: #{tpu_custom_call.1} parent=71 // pred_check_branch
          %618 = sbr.rel (%p616) target = $region100
        $region99: #{tpu_custom_call.1} parent=71 // pred_region
          %620 = dma.done [#allocation16], 512
        $region100: #{tpu_custom_call.1} parent=71 // pred_fallthru
          _
        // Predicated region
        $region101: #{tpu_custom_call.1} parent=71 // pred_check
          %p621 = pneg %p248
        $region102: #{tpu_custom_call.1} parent=71 // pred_check_branch
          %623 = sbr.rel (%p621) target = $region104
        $region103: #{tpu_custom_call.1} parent=71 // pred_region
          %625 = dma.done [#allocation19], 512
        $region104: #{tpu_custom_call.1} parent=71 // pred_fallthru
          _
        %s626 = sand.u32 %s67, 1
        %s627 = scalar_lea.sflag [#allocation7], %s626
        %s628 = sand.u32 %s67, 1
        %s629 = smul.addr %s628, 8
        %s630 = scalar_lea.vmem [#allocation6], %s629
        %p631 = pneg %p80
        %p632 = pneg %p77
        %s633 = sand.u32 %s38, 1
        %s634 = scalar_lea.sflag [#allocation10], %s633
        %s635 = sand.u32 %s95, 1
        %s636 = smul.addr %s635, 8
        %s637 = scalar_lea.vmem [#allocation9], %s636
        %p638 = pneg %p108
        %p639 = pneg %p105
        %s640 = sand.u32 %s38, 1
        %s641 = scalar_lea.sflag [#allocation10], %s640
        %s642 = sand.u32 %s123, 1
        %s643 = smul.addr %s642, 16
        %s644 = scalar_lea.vmem [#allocation11], %s643
        %p645 = pneg %p136
        %p646 = pneg %p133
        %s647 = sand.u32 %s38, 1
        %s648 = scalar_lea.sflag [#allocation13], %s647
        %s649 = sand.u32 %s151, 1
        %s650 = smul.addr %s649, 16
        %s651 = scalar_lea.vmem [#allocation12], %s650
        %p652 = pneg %p164
        %p653 = pneg %p161
        %p654 = pneg %p185
        %p655 = pneg %p182
        %p656 = pneg %p206
        %p657 = pneg %p203
        %p658 = pneg %p227
        %p659 = pneg %p224
        %p660 = pneg %p248
        %p661 = pneg %p245
        %p662 = pneg %p269
        %p663 = pneg %p266
        %p664 = pneg %p290
        %p665 = pneg %p287
        %p666 = pneg %p311
        %p667 = pneg %p308
        %p668 = pneg %p332
        %p669 = pneg %p329
        %p670 = pneg %p353
        %p671 = pneg %p350
        %p672 = pneg %p381
        %p673 = pneg %p378
        %s674 = sand.u32 %s368, 1
        %s675 = scalar_lea.sflag [#allocation8], %s674
        %s676 = sand.u32 %s368, 1
        %s677 = smul.addr %s676, 8
        %s678 = scalar_lea.vmem [#allocation20], %s677
        %s679 = smul.u32 2, %s45
        %s680 = smul.u32 2, %s45
        %p681 = scmp.eq.s32.totalorder %s45, 0
        // Predicated region
        $region105: #{tpu_custom_call.1} parent=71 // pred_check
          %p682 = pneg %p681
        $region106: #{tpu_custom_call.1} parent=71 // pred_check_branch
          %684 = sbr.rel (%p682) target = $region108
        $region107: #{tpu_custom_call.1} parent=71 // pred_region
          %vm685 = vcmask 7168
          %686 = vst.msk [vmem:[#allocation3] sm:$0xff] %vm685, -inf
          %687 = vst.msk [vmem:[#allocation3 + $0x8] sm:$0xff] %vm685, -inf
          %688 = vst.msk [vmem:[#allocation3 + $0x10] sm:$0xff] %vm685, -inf
          %689 = vst.msk [vmem:[#allocation3 + $0x18] sm:$0xff] %vm685, -inf
          %690 = vst.msk [vmem:[#allocation4] sm:$0xff] %vm685, 0.0
          %691 = vst.msk [vmem:[#allocation4 + $0x8] sm:$0xff] %vm685, 0.0
          %692 = vst.msk [vmem:[#allocation4 + $0x10] sm:$0xff] %vm685, 0.0
          %693 = vst.msk [vmem:[#allocation4 + $0x18] sm:$0xff] %vm685, 0.0
          %vm694 = vcmask 64512
          %695 = vst.msk [vmem:[#allocation5] sm:$0xff] %vm694, 0.0
          %696 = vst.msk [vmem:[#allocation5 + $0x8] sm:$0xff] %vm694, 0.0
          %697 = vst.msk [vmem:[#allocation5 + $0x10] sm:$0xff] %vm694, 0.0
          %698 = vst.msk [vmem:[#allocation5 + $0x18] sm:$0xff] %vm694, 0.0
          %v699 = vld [vmem:[%s570] sm:$0xff]
          %v700 = vld [vmem:[%s580] sm:$0xff]
          %v701 = vadd.f32 %v699, %v700
          %v702 = vld [vmem:[#allocation14] sm:$0xff]
          %v703 = vld [vmem:[#allocation14 + $0x8] sm:$0xff]
          %v704 = vld [vmem:[#allocation14 + $0x10] sm:$0xff]
          %v705 = vld [vmem:[#allocation14 + $0x18] sm:$0xff]
          %v706 = vld [vmem:[%s8] sm:$0x1]
          %v708 = vperm.slane %v706, 0
          %vm710 = vcmask 261120
          %v712 = vsel %vm710, %v701, 0
          %714 = vmatpush.msra.mxu0 0.0
          %715 = vmatpush.msra.mxu0 0.0
          %716 = vmatpush.msra.mxu0 0.0
          %717 = vmatpush.msra.mxu0 0.0
          %718 = vmatpush.msra.mxu0 0.0
          %719 = vmatpush.msra.mxu0 0.0
          %720 = vmatpush.msra.mxu0 0.0
          %721 = vmatpush.msra.mxu0 0.0
          %722 = vmatpush.msra.mxu0 0.0
          %723 = vmatpush.msra.mxu0 0.0
          %724 = vmatpush.msra.mxu0 0.0
          %725 = vmatpush.msra.mxu0 0.0
          %726 = vmatpush.msra.mxu0 %v705
          %727 = vmatpush.msra.mxu0 %v704
          %728 = vmatpush.msra.mxu0 %v703
          %729 = vmatpush.msra.mxu0 %v702
          %730 = vmatmul.f32.gmra.mxu0 %v712
          %v731 = vpop.f32.mrf.mxu0
          %v732 = vadd.f32 %v708, %v731
          %733 = vdwg.mxu0
          %734 = vst.msk [vmem:[#allocation2] sm:$0xff] %vm694, %v732
          %736 = vrot.lane.b32.xlu0 %v732, 120
          %v737 = vpop.permute.xlu0 %736
          %s739 = scalar_lea.vmem [#allocation2], 8
          %740 = vst.msk [vmem:[%s739] sm:$0xff] %vm694, %v737
          %741 = vrot.lane.b32.xlu0 %v732, 112
          %v742 = vpop.permute.xlu0 %741
          %s744 = scalar_lea.vmem [#allocation2], 16
          %745 = vst.msk [vmem:[%s744] sm:$0xff] %vm694, %v742
          %746 = vrot.lane.b32.xlu0 %v732, 104
          %v747 = vpop.permute.xlu0 %746
          %s749 = scalar_lea.vmem [#allocation2], 24
          %750 = vst.msk [vmem:[%s749] sm:$0xff] %vm694, %v747
        $region108: #{tpu_custom_call.1} parent=71 // pred_fallthru
          _
        %v751 = vld [vmem:[%s590] sm:$0xff]
        %v752 = vld [vmem:[%s590 + $0x8] sm:$0xff]
        %v753 = vld [vmem:[%s600] sm:$0xff]
        %v754 = vld [vmem:[%s600 + $0x8] sm:$0xff]
        %v755 = vadd.f32 %v751, %v753
        %v756 = vadd.f32 %v752, %v754
        %v757 = vld [vmem:[#allocation15] sm:$0xff]
        %v758 = vld [vmem:[#allocation15 + $0x8] sm:$0xff]
        %v759 = vld [vmem:[#allocation15 + $0x10] sm:$0xff]
        %v760 = vld [vmem:[#allocation15 + $0x18] sm:$0xff]
        %vm761 = vcmask 261120
        %v763 = vsel %vm761, %v755, 0
        %v766 = vsel %vm761, %v756, 0
        %768 = vmatpush.msra.mxu0 0.0
        %769 = vmatpush.msra.mxu0 0.0
        %770 = vmatpush.msra.mxu0 0.0
        %771 = vmatpush.msra.mxu0 0.0
        %772 = vmatpush.msra.mxu0 0.0
        %773 = vmatpush.msra.mxu0 0.0
        %774 = vmatpush.msra.mxu0 0.0
        %775 = vmatpush.msra.mxu0 0.0
        %776 = vmatpush.msra.mxu0 0.0
        %777 = vmatpush.msra.mxu0 0.0
        %778 = vmatpush.msra.mxu0 0.0
        %779 = vmatpush.msra.mxu0 0.0
        %780 = vmatpush.msra.mxu0 %v760
        %781 = vmatpush.msra.mxu0 %v759
        %782 = vmatpush.msra.mxu0 %v758
        %783 = vmatpush.msra.mxu0 %v757
        %784 = vmatmul.f32.gmra.mxu0 %v763
        %v785 = vpop.f32.mrf.mxu0
        %v786 = vadd.f32 0.0, %v785
        %787 = vmatmul.f32.gmra.mxu0 %v766
        %v788 = vpop.f32.mrf.mxu0
        %v789 = vadd.f32 0.0, %v788
        %790 = vdwg.mxu0
        %v791 = vld [vmem:[#allocation17] sm:$0xff]
        %v792 = vld [vmem:[#allocation17 + $0x8] sm:$0xff]
        %v793 = vld [vmem:[#allocation17 + $0x10] sm:$0xff]
        %v794 = vld [vmem:[#allocation17 + $0x18] sm:$0xff]
        %v795 = vld [vmem:[%s9] sm:$0x1]
        %v797 = vperm.slane %v795, 0
        %v800 = vsel %vm761, %v751, 0
        %v803 = vsel %vm761, %v752, 0
        %805 = vmatpush.msra.mxu0 0.0
        %806 = vmatpush.msra.mxu0 0.0
        %807 = vmatpush.msra.mxu0 0.0
        %808 = vmatpush.msra.mxu0 0.0
        %809 = vmatpush.msra.mxu0 0.0
        %810 = vmatpush.msra.mxu0 0.0
        %811 = vmatpush.msra.mxu0 0.0
        %812 = vmatpush.msra.mxu0 0.0
        %813 = vmatpush.msra.mxu0 0.0
        %814 = vmatpush.msra.mxu0 0.0
        %815 = vmatpush.msra.mxu0 0.0
        %816 = vmatpush.msra.mxu0 0.0
        %817 = vmatpush.msra.mxu0 %v794
        %818 = vmatpush.msra.mxu0 %v793
        %819 = vmatpush.msra.mxu0 %v792
        %820 = vmatpush.msra.mxu0 %v791
        %821 = vmatmul.f32.gmra.mxu0 %v800
        %v822 = vpop.f32.mrf.mxu0
        %v823 = vadd.f32 %v797, %v822
        %824 = vmatmul.f32.gmra.mxu0 %v803
        %v825 = vpop.f32.mrf.mxu0
        %v826 = vadd.f32 %v797, %v825
        %827 = vdwg.mxu0
        %v828 = vld [vmem:[#allocation2] sm:$0xff]
        %vm829 = vcmask 64512
        %v831 = vsel %vm829, %v828, 0
        %v834 = vsel %vm829, %v786, 0
        %v837 = vsel %vm829, %v789, 0
        %839 = vmatpush.xpose.msra.mxu0 0.0
        %840 = vmatpush.xpose.msra.mxu0 0.0
        %841 = vmatpush.xpose.msra.mxu0 0.0
        %842 = vmatpush.xpose.msra.mxu0 0.0
        %843 = vmatpush.xpose.msra.mxu0 0.0
        %844 = vmatpush.xpose.msra.mxu0 0.0
        %845 = vmatpush.xpose.msra.mxu0 0.0
        %846 = vmatpush.xpose.msra.mxu0 0.0
        %847 = vmatpush.xpose.msra.mxu0 0.0
        %848 = vmatpush.xpose.msra.mxu0 0.0
        %849 = vmatpush.xpose.msra.mxu0 0.0
        %850 = vmatpush.xpose.msra.mxu0 0.0
        %851 = vmatpush.xpose.msra.mxu0 0.0
        %852 = vmatpush.xpose.msra.mxu0 0.0
        %853 = vmatpush.xpose.msra.mxu0 %v837
        %854 = vmatpush.xpose.msra.mxu0 %v834
        %855 = vmatmul.f32.gmra.mxu0 %v831
        %v856 = vpop.f32.mrf.mxu0
        %v857 = vadd.f32 0.0, %v856
        %858 = vdwg.mxu0
        %v859 = vld [vmem:[#allocation3] sm:$0xff]
        %vm860 = vcmask 130048
        %v861 = vsel %vm860, %v857, -inf
        %862 = vmax.xlane.f32.xlu0 %v861
        %v863 = vpop.xlane.xlu0 %862
        %v864 = vmax.f32 %v859, %v863
        %v865 = vsub.f32 %v859, %v864
        %v866 = vmul.f32 %v865, 1.442695
        %v867 = vpow.pop %v866
        %869 = vset.pattern.permute.xlu0 0
        %870 = vperm.xlu0 %869, %v864
        %v871 = vpop.permute.xlu0 %870
        %v873 = vsub.f32 %v857, %v871
        %v874 = vmul.f32 %v873, 1.442695
        %v875 = vpow.pop %v874
        %v876 = vld [vmem:[#allocation4] sm:$0xff]
        %v877 = vmul.f32 %v867, %v876
        %v878 = vsel %vm860, %v875, 0.0
        %879 = vadd.xlane.f32.xlu0 %v878
        %v880 = vpop.xlane.xlu0 %879
        %v881 = vadd.f32 %v877, %v880
        %vm882 = vcmask 7168
        %883 = vst.msk [vmem:[#allocation4] sm:$0xff] %vm882, %v881
        %v884 = vld [vmem:[#allocation5] sm:$0xff]
        %886 = vset.pattern.permute.xlu0 0
        %887 = vperm.xlu0 %886, %v867
        %v888 = vpop.permute.xlu0 %887
        %v890 = vmul.f32 %v888, %v884
        %v892 = vsel %vm860, %v875, 0
        %894 = vmatpush.msra.mxu0 0.0
        %895 = vmatpush.msra.mxu0 0.0
        %896 = vmatpush.msra.mxu0 0.0
        %897 = vmatpush.msra.mxu0 0.0
        %898 = vmatpush.msra.mxu0 0.0
        %899 = vmatpush.msra.mxu0 0.0
        %900 = vmatpush.msra.mxu0 0.0
        %901 = vmatpush.msra.mxu0 0.0
        %902 = vmatpush.msra.mxu0 0.0
        %903 = vmatpush.msra.mxu0 0.0
        %904 = vmatpush.msra.mxu0 0.0
        %905 = vmatpush.msra.mxu0 0.0
        %906 = vmatpush.msra.mxu0 0.0
        %907 = vmatpush.msra.mxu0 0.0
        %908 = vmatpush.msra.mxu0 %v826
        %909 = vmatpush.msra.mxu0 %v823
        %910 = vmatmul.f32.gmra.mxu0 %v892
        %v911 = vpop.f32.mrf.mxu0
        %v912 = vadd.f32 0.0, %v911
        %913 = vdwg.mxu0
        %v914 = vadd.f32 %v890, %v912
        %915 = vst.msk [vmem:[#allocation5] sm:$0xff] %vm829, %v914
        %916 = vst.msk [vmem:[#allocation3] sm:$0xff] %vm882, %v864
        %s917 = scalar_lea.vmem [#allocation2], 8
        %v918 = vld [vmem:[%s917] sm:$0xff]
        %919 = vrot.lane.b32.xlu0 %v786, 120
        %v920 = vpop.permute.xlu0 %919
        %921 = vrot.lane.b32.xlu0 %v789, 120
        %v922 = vpop.permute.xlu0 %921
        %v924 = vsel %vm829, %v918, 0
        %v926 = vsel %vm829, %v920, 0
        %v928 = vsel %vm829, %v922, 0
        %930 = vmatpush.xpose.msra.mxu0 0.0
        %931 = vmatpush.xpose.msra.mxu0 0.0
        %932 = vmatpush.xpose.msra.mxu0 0.0
        %933 = vmatpush.xpose.msra.mxu0 0.0
        %934 = vmatpush.xpose.msra.mxu0 0.0
        %935 = vmatpush.xpose.msra.mxu0 0.0
        %936 = vmatpush.xpose.msra.mxu0 0.0
        %937 = vmatpush.xpose.msra.mxu0 0.0
        %938 = vmatpush.xpose.msra.mxu0 0.0
        %939 = vmatpush.xpose.msra.mxu0 0.0
        %940 = vmatpush.xpose.msra.mxu0 0.0
        %941 = vmatpush.xpose.msra.mxu0 0.0
        %942 = vmatpush.xpose.msra.mxu0 0.0
        %943 = vmatpush.xpose.msra.mxu0 0.0
        %944 = vmatpush.xpose.msra.mxu0 %v928
        %945 = vmatpush.xpose.msra.mxu0 %v926
        %946 = vmatmul.f32.gmra.mxu0 %v924
        %v947 = vpop.f32.mrf.mxu0
        %v948 = vadd.f32 0.0, %v947
        %949 = vdwg.mxu0
        %s950 = scalar_lea.vmem [#allocation3], 8
        %v951 = vld [vmem:[%s950] sm:$0xff]
        %v952 = vsel %vm860, %v948, -inf
        %953 = vmax.xlane.f32.xlu0 %v952
        %v954 = vpop.xlane.xlu0 %953
        %v955 = vmax.f32 %v951, %v954
        %v956 = vsub.f32 %v951, %v955
        %v957 = vmul.f32 %v956, 1.442695
        %v958 = vpow.pop %v957
        %960 = vset.pattern.permute.xlu0 0
        %961 = vperm.xlu0 %960, %v955
        %v962 = vpop.permute.xlu0 %961
        %v964 = vsub.f32 %v948, %v962
        %v965 = vmul.f32 %v964, 1.442695
        %v966 = vpow.pop %v965
        %s967 = scalar_lea.vmem [#allocation4], 8
        %v968 = vld [vmem:[%s967] sm:$0xff]
        %v969 = vmul.f32 %v958, %v968
        %v970 = vsel %vm860, %v966, 0.0
        %971 = vadd.xlane.f32.xlu0 %v970
        %v972 = vpop.xlane.xlu0 %971
        %v973 = vadd.f32 %v969, %v972
        %974 = vst.msk [vmem:[%s967] sm:$0xff] %vm882, %v973
        %s975 = scalar_lea.vmem [#allocation5], 8
        %v976 = vld [vmem:[%s975] sm:$0xff]
        %978 = vset.pattern.permute.xlu0 0
        %979 = vperm.xlu0 %978, %v958
        %v980 = vpop.permute.xlu0 %979
        %v982 = vmul.f32 %v980, %v976
        %985 = vrot.lane.b32.xlu0 %v823, 120
        %v986 = vpop.permute.xlu0 %985
        %987 = vrot.lane.b32.xlu0 %v826, 120
        %v988 = vpop.permute.xlu0 %987
        %v992 = vsel %vm860, %v966, 0
        %994 = vmatpush.msra.mxu0 0.0
        %995 = vmatpush.msra.mxu0 0.0
        %996 = vmatpush.msra.mxu0 0.0
        %997 = vmatpush.msra.mxu0 0.0
        %998 = vmatpush.msra.mxu0 0.0
        %999 = vmatpush.msra.mxu0 0.0
        %1000 = vmatpush.msra.mxu0 0.0
        %1001 = vmatpush.msra.mxu0 0.0
        %1002 = vmatpush.msra.mxu0 0.0
        %1003 = vmatpush.msra.mxu0 0.0
        %1004 = vmatpush.msra.mxu0 0.0
        %1005 = vmatpush.msra.mxu0 0.0
        %1006 = vmatpush.msra.mxu0 0.0
        %1007 = vmatpush.msra.mxu0 0.0
        %1008 = vmatpush.msra.mxu0 %v988
        %1009 = vmatpush.msra.mxu0 %v986
        %1010 = vmatmul.f32.gmra.mxu0 %v992
        %v1011 = vpop.f32.mrf.mxu0
        %v1012 = vadd.f32 0.0, %v1011
        %1013 = vdwg.mxu0
        %v1014 = vadd.f32 %v982, %v1012
        %1015 = vst.msk [vmem:[%s975] sm:$0xff] %vm829, %v1014
        %1016 = vst.msk [vmem:[%s950] sm:$0xff] %vm882, %v955
        %s1017 = scalar_lea.vmem [#allocation2], 16
        %v1018 = vld [vmem:[%s1017] sm:$0xff]
        %1019 = vrot.lane.b32.xlu0 %v786, 112
        %v1020 = vpop.permute.xlu0 %1019
        %1021 = vrot.lane.b32.xlu0 %v789, 112
        %v1022 = vpop.permute.xlu0 %1021
        %v1024 = vsel %vm829, %v1018, 0
        %v1026 = vsel %vm829, %v1020, 0
        %v1028 = vsel %vm829, %v1022, 0
        %1030 = vmatpush.xpose.msra.mxu0 0.0
        %1031 = vmatpush.xpose.msra.mxu0 0.0
        %1032 = vmatpush.xpose.msra.mxu0 0.0
        %1033 = vmatpush.xpose.msra.mxu0 0.0
        %1034 = vmatpush.xpose.msra.mxu0 0.0
        %1035 = vmatpush.xpose.msra.mxu0 0.0
        %1036 = vmatpush.xpose.msra.mxu0 0.0
        %1037 = vmatpush.xpose.msra.mxu0 0.0
        %1038 = vmatpush.xpose.msra.mxu0 0.0
        %1039 = vmatpush.xpose.msra.mxu0 0.0
        %1040 = vmatpush.xpose.msra.mxu0 0.0
        %1041 = vmatpush.xpose.msra.mxu0 0.0
        %1042 = vmatpush.xpose.msra.mxu0 0.0
        %1043 = vmatpush.xpose.msra.mxu0 0.0
        %1044 = vmatpush.xpose.msra.mxu0 %v1028
        %1045 = vmatpush.xpose.msra.mxu0 %v1026
        %1046 = vmatmul.f32.gmra.mxu0 %v1024
        %v1047 = vpop.f32.mrf.mxu0
        %v1048 = vadd.f32 0.0, %v1047
        %1049 = vdwg.mxu0
        %s1050 = scalar_lea.vmem [#allocation3], 16
        %v1051 = vld [vmem:[%s1050] sm:$0xff]
        %v1052 = vsel %vm860, %v1048, -inf
        %1053 = vmax.xlane.f32.xlu0 %v1052
        %v1054 = vpop.xlane.xlu0 %1053
        %v1055 = vmax.f32 %v1051, %v1054
        %v1056 = vsub.f32 %v1051, %v1055
        %v1057 = vmul.f32 %v1056, 1.442695
        %v1058 = vpow.pop %v1057
        %1060 = vset.pattern.permute.xlu0 0
        %1061 = vperm.xlu0 %1060, %v1055
        %v1062 = vpop.permute.xlu0 %1061
        %v1064 = vsub.f32 %v1048, %v1062
        %v1065 = vmul.f32 %v1064, 1.442695
        %v1066 = vpow.pop %v1065
        %s1067 = scalar_lea.vmem [#allocation4], 16
        %v1068 = vld [vmem:[%s1067] sm:$0xff]
        %v1069 = vmul.f32 %v1058, %v1068
        %v1070 = vsel %vm860, %v1066, 0.0
        %1071 = vadd.xlane.f32.xlu0 %v1070
        %v1072 = vpop.xlane.xlu0 %1071
        %v1073 = vadd.f32 %v1069, %v1072
        %1074 = vst.msk [vmem:[%s1067] sm:$0xff] %vm882, %v1073
        %s1075 = scalar_lea.vmem [#allocation5], 16
        %v1076 = vld [vmem:[%s1075] sm:$0xff]
        %1078 = vset.pattern.permute.xlu0 0
        %1079 = vperm.xlu0 %1078, %v1058
        %v1080 = vpop.permute.xlu0 %1079
        %v1082 = vmul.f32 %v1080, %v1076
        %1083 = vrot.lane.b32.xlu0 %v823, 112
        %v1084 = vpop.permute.xlu0 %1083
        %1085 = vrot.lane.b32.xlu0 %v826, 112
        %v1086 = vpop.permute.xlu0 %1085
        %v1090 = vsel %vm860, %v1066, 0
        %1092 = vmatpush.msra.mxu0 0.0
        %1093 = vmatpush.msra.mxu0 0.0
        %1094 = vmatpush.msra.mxu0 0.0
        %1095 = vmatpush.msra.mxu0 0.0
        %1096 = vmatpush.msra.mxu0 0.0
        %1097 = vmatpush.msra.mxu0 0.0
        %1098 = vmatpush.msra.mxu0 0.0
        %1099 = vmatpush.msra.mxu0 0.0
        %1100 = vmatpush.msra.mxu0 0.0
        %1101 = vmatpush.msra.mxu0 0.0
        %1102 = vmatpush.msra.mxu0 0.0
        %1103 = vmatpush.msra.mxu0 0.0
        %1104 = vmatpush.msra.mxu0 0.0
        %1105 = vmatpush.msra.mxu0 0.0
        %1106 = vmatpush.msra.mxu0 %v1086
        %1107 = vmatpush.msra.mxu0 %v1084
        %1108 = vmatmul.f32.gmra.mxu0 %v1090
        %v1109 = vpop.f32.mrf.mxu0
        %v1110 = vadd.f32 0.0, %v1109
        %1111 = vdwg.mxu0
        %v1112 = vadd.f32 %v1082, %v1110
        %1113 = vst.msk [vmem:[%s1075] sm:$0xff] %vm829, %v1112
        %1114 = vst.msk [vmem:[%s1050] sm:$0xff] %vm882, %v1055
        %s1115 = scalar_lea.vmem [#allocation2], 24
        %v1116 = vld [vmem:[%s1115] sm:$0xff]
        %1117 = vrot.lane.b32.xlu0 %v786, 104
        %v1118 = vpop.permute.xlu0 %1117
        %1119 = vrot.lane.b32.xlu0 %v789, 104
        %v1120 = vpop.permute.xlu0 %1119
        %v1122 = vsel %vm829, %v1116, 0
        %v1124 = vsel %vm829, %v1118, 0
        %v1126 = vsel %vm829, %v1120, 0
        %1128 = vmatpush.xpose.msra.mxu0 0.0
        %1129 = vmatpush.xpose.msra.mxu0 0.0
        %1130 = vmatpush.xpose.msra.mxu0 0.0
        %1131 = vmatpush.xpose.msra.mxu0 0.0
        %1132 = vmatpush.xpose.msra.mxu0 0.0
        %1133 = vmatpush.xpose.msra.mxu0 0.0
        %1134 = vmatpush.xpose.msra.mxu0 0.0
        %1135 = vmatpush.xpose.msra.mxu0 0.0
        %1136 = vmatpush.xpose.msra.mxu0 0.0
        %1137 = vmatpush.xpose.msra.mxu0 0.0
        %1138 = vmatpush.xpose.msra.mxu0 0.0
        %1139 = vmatpush.xpose.msra.mxu0 0.0
        %1140 = vmatpush.xpose.msra.mxu0 0.0
        %1141 = vmatpush.xpose.msra.mxu0 0.0
        %1142 = vmatpush.xpose.msra.mxu0 %v1126
        %1143 = vmatpush.xpose.msra.mxu0 %v1124
        %1144 = vmatmul.f32.gmra.mxu0 %v1122
        %v1145 = vpop.f32.mrf.mxu0
        %v1146 = vadd.f32 0.0, %v1145
        %1147 = vdwg.mxu0
        %s1148 = scalar_lea.vmem [#allocation3], 24
        %v1149 = vld [vmem:[%s1148] sm:$0xff]
        %v1150 = vsel %vm860, %v1146, -inf
        %1151 = vmax.xlane.f32.xlu0 %v1150
        %v1152 = vpop.xlane.xlu0 %1151
        %v1153 = vmax.f32 %v1149, %v1152
        %v1154 = vsub.f32 %v1149, %v1153
        %v1155 = vmul.f32 %v1154, 1.442695
        %v1156 = vpow.pop %v1155
        %1158 = vset.pattern.permute.xlu0 0
        %1159 = vperm.xlu0 %1158, %v1153
        %v1160 = vpop.permute.xlu0 %1159
        %v1162 = vsub.f32 %v1146, %v1160
        %v1163 = vmul.f32 %v1162, 1.442695
        %v1164 = vpow.pop %v1163
        %s1165 = scalar_lea.vmem [#allocation4], 24
        %v1166 = vld [vmem:[%s1165] sm:$0xff]
        %v1167 = vmul.f32 %v1156, %v1166
        %v1168 = vsel %vm860, %v1164, 0.0
        %1169 = vadd.xlane.f32.xlu0 %v1168
        %v1170 = vpop.xlane.xlu0 %1169
        %v1171 = vadd.f32 %v1167, %v1170
        %1172 = vst.msk [vmem:[%s1165] sm:$0xff] %vm882, %v1171
        %s1173 = scalar_lea.vmem [#allocation5], 24
        %v1174 = vld [vmem:[%s1173] sm:$0xff]
        %1176 = vset.pattern.permute.xlu0 0
        %1177 = vperm.xlu0 %1176, %v1156
        %v1178 = vpop.permute.xlu0 %1177
        %v1180 = vmul.f32 %v1178, %v1174
        %1181 = vrot.lane.b32.xlu0 %v823, 104
        %v1182 = vpop.permute.xlu0 %1181
        %1183 = vrot.lane.b32.xlu0 %v826, 104
        %v1184 = vpop.permute.xlu0 %1183
        %v1188 = vsel %vm860, %v1164, 0
        %1190 = vmatpush.msra.mxu0 0.0
        %1191 = vmatpush.msra.mxu0 0.0
        %1192 = vmatpush.msra.mxu0 0.0
        %1193 = vmatpush.msra.mxu0 0.0
        %1194 = vmatpush.msra.mxu0 0.0
        %1195 = vmatpush.msra.mxu0 0.0
        %1196 = vmatpush.msra.mxu0 0.0
        %1197 = vmatpush.msra.mxu0 0.0
        %1198 = vmatpush.msra.mxu0 0.0
        %1199 = vmatpush.msra.mxu0 0.0
        %1200 = vmatpush.msra.mxu0 0.0
        %1201 = vmatpush.msra.mxu0 0.0
        %1202 = vmatpush.msra.mxu0 0.0
        %1203 = vmatpush.msra.mxu0 0.0
        %1204 = vmatpush.msra.mxu0 %v1184
        %1205 = vmatpush.msra.mxu0 %v1182
        %1206 = vmatmul.f32.gmra.mxu0 %v1188
        %v1207 = vpop.f32.mrf.mxu0
        %v1208 = vadd.f32 0.0, %v1207
        %1209 = vdwg.mxu0
        %v1210 = vadd.f32 %v1180, %v1208
        %1211 = vst.msk [vmem:[%s1173] sm:$0xff] %vm829, %v1210
        %1212 = vst.msk [vmem:[%s1148] sm:$0xff] %vm882, %v1153
        // Predicated region
        $region109: #{tpu_custom_call.1} parent=71 // pred_check
          %p1213 = pneg %p681
        $region110: #{tpu_custom_call.1} parent=71 // pred_check_branch
          %1215 = sbr.rel (%p1213) target = $region112
        $region111: #{tpu_custom_call.1} parent=71 // pred_region
          %v1216 = vld [vmem:[%s10] sm:$0x1]
          %v1217 = vld [vmem:[#allocation4] sm:$0xff]
          %v1218 = vrcp.pop %v1217
          %v1219 = vmul.f32 %v1217, %v1218
          %v1220 = vsub.f32 1.0, %v1219
          %v1221 = vmul.f32 %v1218, %v1220
          %v1222 = vadd.f32 %v1218, %v1221
          %vm1223 = vweird.f32 %v1217
          %vm1224 = vweird.f32 %v1218
          %vm1225 = vmor %vm1223, %vm1224
          %v1226 = vsel %vm1225, %v1218, %v1222
          %v1227 = vand.u32 2147483647, %v1217
          %vm1228 = vcmp.eq.f32.partialorder %v1227, 8.507059e+37
          %v1229 = vand.u32 %v1217, 2147483648
          %v1230 = vor.u32 1.1754944e-38, %v1229
          %v1231 = vsel %vm1228, %v1230, %v1226
          %v1232 = vld [vmem:[#allocation5] sm:$0xff]
          %1234 = vset.pattern.permute.xlu0 0
          %1235 = vperm.xlu0 %1234, %v1231
          %v1236 = vpop.permute.xlu0 %1235
          %v1238 = vmul.f32 %v1232, %v1236
          %v1239 = vld [vmem:[#allocation18] sm:$0xff]
          %v1241 = vsel %vm829, %v1238, 0
          %1243 = vmatpush.msra.mxu0 0.0
          %1244 = vmatpush.msra.mxu0 0.0
          %1245 = vmatpush.msra.mxu0 0.0
          %1246 = vmatpush.msra.mxu0 0.0
          %1247 = vmatpush.msra.mxu0 0.0
          %1248 = vmatpush.msra.mxu0 0.0
          %1249 = vmatpush.msra.mxu0 0.0
          %1250 = vmatpush.msra.mxu0 0.0
          %1251 = vmatpush.msra.mxu0 0.0
          %1252 = vmatpush.msra.mxu0 0.0
          %1253 = vmatpush.msra.mxu0 0.0
          %1254 = vmatpush.msra.mxu0 0.0
          %1255 = vmatpush.msra.mxu0 0.0
          %1256 = vmatpush.msra.mxu0 0.0
          %1257 = vmatpush.msra.mxu0 0.0
          %1258 = vmatpush.msra.mxu0 %v1239
          %1259 = vmatmul.f32.gmra.mxu0 %v1241
          %v1260 = vpop.f32.mrf.mxu0
          %v1261 = vadd.f32 0.0, %v1260
          %1262 = vdwg.mxu0
          %v1264 = vperm.slane %v1216, 0
          %v1266 = vadd.f32 %v1264, %v1261
          %v1267 = vld [vmem:[%s967] sm:$0xff]
          %v1268 = vrcp.pop %v1267
          %v1269 = vmul.f32 %v1267, %v1268
          %v1270 = vsub.f32 1.0, %v1269
          %v1271 = vmul.f32 %v1268, %v1270
          %v1272 = vadd.f32 %v1268, %v1271
          %vm1273 = vweird.f32 %v1267
          %vm1274 = vweird.f32 %v1268
          %vm1275 = vmor %vm1273, %vm1274
          %v1276 = vsel %vm1275, %v1268, %v1272
          %v1277 = vand.u32 2147483647, %v1267
          %vm1278 = vcmp.eq.f32.partialorder %v1277, 8.507059e+37
          %v1279 = vand.u32 %v1267, 2147483648
          %v1280 = vor.u32 1.1754944e-38, %v1279
          %v1281 = vsel %vm1278, %v1280, %v1276
          %v1282 = vld [vmem:[%s975] sm:$0xff]
          %1284 = vset.pattern.permute.xlu0 0
          %1285 = vperm.xlu0 %1284, %v1281
          %v1286 = vpop.permute.xlu0 %1285
          %v1288 = vmul.f32 %v1282, %v1286
          %s1289 = scalar_lea.vmem [#allocation18], 8
          %v1290 = vld [vmem:[%s1289] sm:$0xff]
          %v1292 = vsel %vm829, %v1288, 0
          %1294 = vmatpush.msra.mxu0 0.0
          %1295 = vmatpush.msra.mxu0 0.0
          %1296 = vmatpush.msra.mxu0 0.0
          %1297 = vmatpush.msra.mxu0 0.0
          %1298 = vmatpush.msra.mxu0 0.0
          %1299 = vmatpush.msra.mxu0 0.0
          %1300 = vmatpush.msra.mxu0 0.0
          %1301 = vmatpush.msra.mxu0 0.0
          %1302 = vmatpush.msra.mxu0 0.0
          %1303 = vmatpush.msra.mxu0 0.0
          %1304 = vmatpush.msra.mxu0 0.0
          %1305 = vmatpush.msra.mxu0 0.0
          %1306 = vmatpush.msra.mxu0 0.0
          %1307 = vmatpush.msra.mxu0 0.0
          %1308 = vmatpush.msra.mxu0 0.0
          %1309 = vmatpush.msra.mxu0 %v1290
          %1310 = vmatmul.f32.gmra.mxu0 %v1292
          %v1311 = vpop.f32.mrf.mxu0
          %v1312 = vadd.f32 0.0, %v1311
          %1313 = vdwg.mxu0
          %v1314 = vadd.f32 %v1266, %v1312
          %v1315 = vld [vmem:[%s1067] sm:$0xff]
          %v1316 = vrcp.pop %v1315
          %v1317 = vmul.f32 %v1315, %v1316
          %v1318 = vsub.f32 1.0, %v1317
          %v1319 = vmul.f32 %v1316, %v1318
          %v1320 = vadd.f32 %v1316, %v1319
          %vm1321 = vweird.f32 %v1315
          %vm1322 = vweird.f32 %v1316
          %vm1323 = vmor %vm1321, %vm1322
          %v1324 = vsel %vm1323, %v1316, %v1320
          %v1325 = vand.u32 2147483647, %v1315
          %vm1326 = vcmp.eq.f32.partialorder %v1325, 8.507059e+37
          %v1327 = vand.u32 %v1315, 2147483648
          %v1328 = vor.u32 1.1754944e-38, %v1327
          %v1329 = vsel %vm1326, %v1328, %v1324
          %v1330 = vld [vmem:[%s1075] sm:$0xff]
          %1332 = vset.pattern.permute.xlu0 0
          %1333 = vperm.xlu0 %1332, %v1329
          %v1334 = vpop.permute.xlu0 %1333
          %v1336 = vmul.f32 %v1330, %v1334
          %s1337 = scalar_lea.vmem [#allocation18], 16
          %v1338 = vld [vmem:[%s1337] sm:$0xff]
          %v1340 = vsel %vm829, %v1336, 0
          %1342 = vmatpush.msra.mxu0 0.0
          %1343 = vmatpush.msra.mxu0 0.0
          %1344 = vmatpush.msra.mxu0 0.0
          %1345 = vmatpush.msra.mxu0 0.0
          %1346 = vmatpush.msra.mxu0 0.0
          %1347 = vmatpush.msra.mxu0 0.0
          %1348 = vmatpush.msra.mxu0 0.0
          %1349 = vmatpush.msra.mxu0 0.0
          %1350 = vmatpush.msra.mxu0 0.0
          %1351 = vmatpush.msra.mxu0 0.0
          %1352 = vmatpush.msra.mxu0 0.0
          %1353 = vmatpush.msra.mxu0 0.0
          %1354 = vmatpush.msra.mxu0 0.0
          %1355 = vmatpush.msra.mxu0 0.0
          %1356 = vmatpush.msra.mxu0 0.0
          %1357 = vmatpush.msra.mxu0 %v1338
          %1358 = vmatmul.f32.gmra.mxu0 %v1340
          %v1359 = vpop.f32.mrf.mxu0
          %v1360 = vadd.f32 0.0, %v1359
          %1361 = vdwg.mxu0
          %v1362 = vadd.f32 %v1314, %v1360
          %v1363 = vld [vmem:[%s1165] sm:$0xff]
          %v1364 = vrcp.pop %v1363
          %v1365 = vmul.f32 %v1363, %v1364
          %v1366 = vsub.f32 1.0, %v1365
          %v1367 = vmul.f32 %v1364, %v1366
          %v1368 = vadd.f32 %v1364, %v1367
          %vm1369 = vweird.f32 %v1363
          %vm1370 = vweird.f32 %v1364
          %vm1371 = vmor %vm1369, %vm1370
          %v1372 = vsel %vm1371, %v1364, %v1368
          %v1373 = vand.u32 2147483647, %v1363
          %vm1374 = vcmp.eq.f32.partialorder %v1373, 8.507059e+37
          %v1375 = vand.u32 %v1363, 2147483648
          %v1376 = vor.u32 1.1754944e-38, %v1375
          %v1377 = vsel %vm1374, %v1376, %v1372
          %v1378 = vld [vmem:[%s1173] sm:$0xff]
          %1380 = vset.pattern.permute.xlu0 0
          %1381 = vperm.xlu0 %1380, %v1377
          %v1382 = vpop.permute.xlu0 %1381
          %v1384 = vmul.f32 %v1378, %v1382
          %s1385 = scalar_lea.vmem [#allocation18], 24
          %v1386 = vld [vmem:[%s1385] sm:$0xff]
          %v1388 = vsel %vm829, %v1384, 0
          %1390 = vmatpush.msra.mxu0 0.0
          %1391 = vmatpush.msra.mxu0 0.0
          %1392 = vmatpush.msra.mxu0 0.0
          %1393 = vmatpush.msra.mxu0 0.0
          %1394 = vmatpush.msra.mxu0 0.0
          %1395 = vmatpush.msra.mxu0 0.0
          %1396 = vmatpush.msra.mxu0 0.0
          %1397 = vmatpush.msra.mxu0 0.0
          %1398 = vmatpush.msra.mxu0 0.0
          %1399 = vmatpush.msra.mxu0 0.0
          %1400 = vmatpush.msra.mxu0 0.0
          %1401 = vmatpush.msra.mxu0 0.0
          %1402 = vmatpush.msra.mxu0 0.0
          %1403 = vmatpush.msra.mxu0 0.0
          %1404 = vmatpush.msra.mxu0 0.0
          %1405 = vmatpush.msra.mxu0 %v1386
          %1406 = vmatmul.f32.gmra.mxu0 %v1388
          %v1407 = vpop.f32.mrf.mxu0
          %v1408 = vadd.f32 0.0, %v1407
          %1409 = vdwg.mxu0
          %v1410 = vadd.f32 %v1362, %v1408
          %v1411 = vld [vmem:[%s570] sm:$0xff]
          %v1412 = vadd.f32 %v1411, %v1410
          %v1413 = vsel %vm761, %v1412, 0.0
          %1414 = vadd.xlane.f32.xlu0 %v1413
          %v1415 = vpop.xlane.xlu0 %1414
          %v1416 = vrcp.pop 32.0
          %v1417 = vmul.f32 32.0, %v1416
          %v1418 = vsub.f32 1.0, %v1417
          %v1419 = vmul.f32 %v1416, %v1418
          %v1420 = vadd.f32 %v1416, %v1419
          %vm1421 = vweird.f32 %v1416
          %v1422 = vsel %vm1421, %v1416, %v1420
          %v1423 = vmul.f32 %v1415, %v1422
          %v1424 = vsub.f32 %v1412, %v1423
          %v1425 = vmul.f32 %v1424, %v1424
          %v1426 = vsel %vm761, %v1425, 0.0
          %1427 = vadd.xlane.f32.xlu0 %v1426
          %v1428 = vpop.xlane.xlu0 %1427
          %v1429 = vmul.f32 %v1428, %v1422
          %v1430 = vadd.f32 %v1429, 1e-05
          %v1431 = vrsqrt.pop %v1430
          %v1432 = vmul.f32 %v1431, %v1430
          %v1433 = vmul.f32 %v1432, %v1431
          %v1434 = vmul.f32 0.5, %v1433
          %v1435 = vsub.f32 1.5, %v1434
          %v1436 = vmul.f32 %v1431, %v1435
          %vm1437 = vweird.f32 %v1430
          %vm1438 = vweird.f32 %v1431
          %vm1439 = vmor %vm1437, %vm1438
          %v1440 = vsel %vm1439, %v1431, %v1436
          %v1441 = vmul.f32 %v1424, %v1440
          %v1442 = vld [vmem:[%s11] sm:$0x1]
          %v1444 = vperm.slane %v1442, 0
          %v1446 = vmul.f32 %v1441, %v1444
          %v1447 = vld [vmem:[%s12] sm:$0x1]
          %v1449 = vperm.slane %v1447, 0
          %v1451 = vadd.f32 %v1446, %v1449
          %1452 = vst.msk [vmem:[%s678] sm:$0xff] %vm761, %v1451
        $region112: #{tpu_custom_call.1} parent=71 // pred_fallthru
          _
        %s1453 = sand.u32 %s368, 1
        %s1454 = scalar_lea.sflag [#allocation8], %s1453
        %s1455 = sand.u32 %s368, 1
        %s1456 = smul.addr %s1455, 8
        %s1457 = scalar_lea.vmem [#allocation20], %s1456
        // Predicated region
        $region113: #{tpu_custom_call.1} parent=71 // pred_check
          %p1458 = pneg %p378
        $region114: #{tpu_custom_call.1} parent=71 // pred_check_branch
          %1460 = sbr.rel (%p1458) target = $region116
        $region115: #{tpu_custom_call.1} parent=71 // pred_region
          %1462 = vsyncadd %s1454, 0
          %s1463 = sadd.s32 %s44, %s43
          %s1464 = smul.addr %s1463, 8
          %s1465 = scalar_lea.hbm %s13, %s1464
          %s1467 = sshll.u32 %s1457, 4
          %s1468 = int_to_ptr.vmem [resolvable:$true] %s1467
          %s1469 = sshll.u32 %s1465, 4
          %s1470 = int_to_ptr.hbm [resolvable:$true] %s1469
          %1472 = dma.vmem_to_hbm [thread:$0]  %s1468, 128, %s1470, %s1454
        $region116: #{tpu_custom_call.1} parent=71 // pred_fallthru
          _
      $region72: #{tpu_custom_call.1} parent=5 // pred_fallthru
        _
      %p1473 = scmp.le.s32.totalorder 2, %s33
      // Predicated region
      $region117: #{tpu_custom_call.1} parent=5 // pred_check
        %p1474 = pneg %p1473
      $region118: #{tpu_custom_call.1} parent=5 // pred_check_branch
        %1476 = sbr.rel (%p1474) target = $region120
      $region119: #{tpu_custom_call.1} parent=5 // pred_region
        %s1477 = ssub.s32 %s33, 2
        // Predicated region
        $region121: #{tpu_custom_call.1} parent=119 // pred_check
          %p1478 = pneg %p384
        $region122: #{tpu_custom_call.1} parent=119 // pred_check_branch
          %1480 = sbr.rel (%p1478) target = $region124
        $region123: #{tpu_custom_call.1} parent=119 // pred_region
          %s1481 = sand.u32 %s369, 1
          %s1482 = scalar_lea.sflag [#allocation8], %s1481
          %s1483 = sand.u32 %s369, 1
          %s1484 = smul.addr %s1483, 8
          %s1485 = scalar_lea.vmem [#allocation20], %s1484
          %1487 = dma.done %s1482, 128
        $region124: #{tpu_custom_call.1} parent=119 // pred_fallthru
          _
      $region120: #{tpu_custom_call.1} parent=5 // pred_fallthru
        _
    $region6: #{tpu_custom_call.1} parent=1 // loop_footer
      %s37 = sadd.s32 1, %s33
    $region7: #{tpu_custom_call.1} parent=1 // loop_footer_branch
      %32 = sbr.rel target = $region3
    $region8: #{tpu_custom_call.1} parent=1 // loop_exit
      _
    %1488 = vsyncpa [#allocation7], 1
    %s1489 = scalar_lea.sflag [#allocation7], 1
    %1490 = vsyncpa %s1489, 1
    %1491 = vsyncpa [#allocation10], 1
    %s1492 = scalar_lea.sflag [#allocation10], 1
    %1493 = vsyncpa %s1492, 1
    %1494 = vsyncpa [#allocation13], 1
    %s1495 = scalar_lea.sflag [#allocation13], 1
    %1496 = vsyncpa %s1495, 1
    %1497 = vsyncpa [#allocation16], 1
    %1498 = vsyncpa [#allocation19], 1
    %1499 = vsyncpa [#allocation8], 1
    %s1500 = scalar_lea.sflag [#allocation8], 1
    %1501 = vsyncpa %s1500, 1

</llo_original>
